<compile_context>
chip_gen: v7x
topology: tpu7x:2x2x1
jax: 0.10.0
libtpu: 0.0.40
codegen_flags: <defaults>
</compile_context>

<pallas_src>
import functools
import math

import jax
import jax.numpy as jnp
from jax import lax
from jax.experimental import pallas as pl
from jax.experimental.pallas import tpu as pltpu


def _heads_per_group(n_head, hs):
    """Largest head-group whose combined lane width is 128-aligned (or full C)."""
    if hs % 128 == 0:
        return 1
    if 128 % hs == 0 and n_head % (128 // hs) == 0:
        return 128 // hs
    return n_head  # full-C slab (covers small-C cases like the demo)


def _attn_kernel(x_ref, wqkv_ref, wpt_ref, o_ref, qkv_ref, cat_ref, *,
                 n_head, head_size, q_blk, kv_blk, heads_per_group, compute_dtype):
    T = x_ref.shape[1]
    hs = head_size
    C = n_head * hs

    x = x_ref[0]                                               # (T, C), compute_dtype

    # Fused QKV projection (Q columns pre-scaled by 1/sqrt(hs) on the host).
    # f32 MXU accumulation, cast to compute_dtype ONCE, one lane-dense store.
    qkv_ref[...] = jnp.dot(x, wqkv_ref[...],
                           preferred_element_type=jnp.float32).astype(compute_dtype)

    # Static causal-mask helper: diff[i, j] = j - i for a (q_blk, kv_blk) tile.
    # Hoisted once (broadcast_in_dim is not CSE'd if emitted per tile).
    row_ids = lax.broadcasted_iota(jnp.int32, (q_blk, kv_blk), 0)
    col_ids = lax.broadcasted_iota(jnp.int32, (q_blk, kv_blk), 1)
    diff = col_ids - row_ids

    n_q = T // q_blk
    n_groups = n_head // heads_per_group
    gw = heads_per_group * hs

    for qi in range(n_q):                                      # static unroll
        q0 = qi * q_blk
        # Causal tile skipping: only KV tiles with k0 <= q0 + q_blk - 1 contribute.
        n_kv = -(-(q0 + q_blk) // kv_blk)

        for g in range(n_groups):
            outs = []
            for hh in range(heads_per_group):
                h = g * heads_per_group + hh
                q = qkv_ref[q0:q0 + q_blk, h * hs:(h + 1) * hs]        # (q_blk, hs)

                m_i = jnp.full((q_blk, 1), -jnp.inf, jnp.float32)
                l_i = jnp.zeros((q_blk, 1), jnp.float32)
                acc = jnp.zeros((q_blk, hs), jnp.float32)

                for ki in range(n_kv):                          # flash KV loop
                    k0 = ki * kv_blk
                    k = qkv_ref[k0:k0 + kv_blk, C + h * hs:C + (h + 1) * hs]
                    v = qkv_ref[k0:k0 + kv_blk, 2 * C + h * hs:2 * C + (h + 1) * hs]

                    # scores tile: q @ k^T via contracting dims (no k.T materialization)
                    s = lax.dot_general(q, k, (((1,), (1,)), ((), ())),
                                        preferred_element_type=jnp.float32)

                    if k0 + kv_blk - 1 > q0:                    # tile crosses diagonal
                        s = jnp.where(diff <= (q0 - k0), s, -jnp.inf)
                    # else: tile fully below diagonal -> unmasked, mask skipped.

                    m_new = jnp.maximum(m_i, jnp.max(s, axis=-1, keepdims=True))
                    alpha = jnp.exp(m_i - m_new)
                    p = jnp.exp(s - m_new)
                    l_i = alpha * l_i + jnp.sum(p, axis=-1, keepdims=True)
                    acc = alpha * acc + jnp.dot(p.astype(compute_dtype), v,
                                                preferred_element_type=jnp.float32)
                    m_i = m_new

                # Deferred normalization: scale (q_blk, hs) once, EUP reciprocal.
                out_h = acc * pl.reciprocal(l_i, approx=True)
                outs.append(out_h.astype(compute_dtype))

            # Lane-dense head-group store into the concat scratch.
            group_out = outs[0] if len(outs) == 1 else jnp.concatenate(outs, axis=-1)
            cat_ref[q0:q0 + q_blk, g * gw:(g + 1) * gw] = group_out

    # Fused output projection: one (T, C) @ (C, C) matmul, one store to the HBM block.
    o_ref[0] = jnp.dot(cat_ref[...], wpt_ref[...],
                       preferred_element_type=jnp.float32).astype(o_ref.dtype)


def prepare_attention_weights(w_attn, w_proj, n_head, *, compute_dtype=jnp.float32):
    """One-time host-side transform of the PyTorch Linear weights.

    w_attn: (3C, C) (c_attn.weight), w_proj: (C, C) (c_proj.weight).
    Returns (wqkv, wpt): wqkv = w_attn^T with Q columns pre-scaled by 1/sqrt(hs),
    wpt = w_proj^T, both cast to compute_dtype.  Do this once per parameter set,
    not per forward call.
    """
    threeC, C = w_attn.shape
    assert threeC == 3 * C and C % n_head == 0
    hs = C // n_head
    scale = 1.0 / math.sqrt(hs)
    w_attn_t = jnp.asarray(w_attn).T                                    # (C, 3C)
    wqkv = jnp.concatenate([w_attn_t[:, :C] * scale, w_attn_t[:, C:]], axis=1)
    wpt = jnp.asarray(w_proj).T
    return wqkv.astype(compute_dtype), wpt.astype(compute_dtype)


def _build_call(B, T, C, n_head, hs, q_blk, kv_blk, hpg, compute_dtype, out_dtype,
                vmem_limit, single_buffer_weights):
    kernel = functools.partial(_attn_kernel, n_head=n_head, head_size=hs,
                               q_blk=q_blk, kv_blk=kv_blk, heads_per_group=hpg,
                               compute_dtype=compute_dtype)
    w_kwargs = dict(pipeline_mode=pl.Buffered(1)) if single_buffer_weights else {}
    return pl.pallas_call(
        kernel,
        out_shape=jax.ShapeDtypeStruct((B, T, C), out_dtype),
        grid_spec=pltpu.PrefetchScalarGridSpec(
            num_scalar_prefetch=0,
            grid=(B,),
            in_specs=[
                pl.BlockSpec((1, T, C), lambda b: (b, 0, 0)),          # x, per-batch
                pl.BlockSpec((C, 3 * C), lambda b: (0, 0), **w_kwargs),  # Wqkv^T resident
                pl.BlockSpec((C, C), lambda b: (0, 0), **w_kwargs),      # Wproj^T resident
            ],
            out_specs=pl.BlockSpec((1, T, C), lambda b: (b, 0, 0)),
            scratch_shapes=[
                pltpu.VMEM((T, 3 * C), compute_dtype),                 # fused QKV buffer
                pltpu.VMEM((T, C), compute_dtype),                     # concat-heads buffer
            ],
        ),
        compiler_params=pltpu.CompilerParams(
            dimension_semantics=("parallel",),
            vmem_limit_bytes=vmem_limit,
        ),
    )


def causal_self_attention(x, wqkv, wpt, n_head, *, q_block=256, kv_block=512):
    """x: (B, T, C); wqkv/wpt from `prepare_attention_weights` (dtype = compute dtype)."""
    B, T, C = x.shape
    assert C % n_head == 0
    assert wqkv.shape == (C, 3 * C) and wpt.shape == (C, C)
    hs = C // n_head
    compute_dtype = wqkv.dtype
    out_dtype = x.dtype
    x_in = x.astype(compute_dtype)

    # Tile sizes (q_block >= 256 keeps the 256-wide v6e/v7x MXU fed); clamp to T
    # and fall back to a single tile when T is not a multiple.
    q_blk = q_block if (q_block <= T and T % q_block == 0) else T
    kv_blk = kv_block if (kv_block <= T and T % kv_block == 0) else T
    hpg = _heads_per_group(n_head, hs)

    # Scoped-VMEM budget sized to the actual footprint (defaults: 16 MiB v5e,
    # 32 MiB v6e/v7x).  Capped at 64 MiB (v7x physical VMEM per TC).
    isz = jnp.dtype(compute_dtype).itemsize
    osz = jnp.dtype(out_dtype).itemsize
    need = (2 * T * C * isz            # x block, double buffered
            + 2 * T * C * osz          # out block, double buffered
            + 2 * (3 * C * C + C * C) * isz   # weights (covers double-buffer fallback)
            + (3 * C + C) * T * isz    # qkv + concat scratch
            + 6 * q_blk * kv_blk * 4   # score-tile f32 intermediates
            + 8 * q_blk * hs * 4)      # flash accumulators / head output
    vmem_limit = int(min(max(int(need * 1.25) + (2 << 20), 16 << 20), 64 << 20))

    try:
        fn = _build_call(B, T, C, n_head, hs, q_blk, kv_blk, hpg, compute_dtype,
                         out_dtype, vmem_limit, single_buffer_weights=True)
        return fn(x_in, wqkv, wpt)
    except Exception:
        # pl.Buffered(1) on the resident weights is a VMEM-only optimization;
        # fall back to default double-buffering if this Pallas build rejects it.
        fn = _build_call(B, T, C, n_head, hs, q_blk, kv_blk, hpg, compute_dtype,
                         out_dtype, vmem_limit, single_buffer_weights=False)
        return fn(x_in, wqkv, wpt)


def _reference(x, w_attn, w_proj, n_head):
    """Pure-JAX transcription of the PyTorch forward (dropout=0, bias=False)."""
    B, T, C = x.shape
    hs = C // n_head
    wq, wk, wv = w_attn[:C], w_attn[C:2 * C], w_attn[2 * C:]
    outs = []
    mask = jnp.tril(jnp.ones((T, T)))
    for i in range(n_head):
        q = x @ wq[i * hs:(i + 1) * hs].T
        k = x @ wk[i * hs:(i + 1) * hs].T
        v = x @ wv[i * hs:(i + 1) * hs].T
        aff = (q @ jnp.swapaxes(k, 1, 2)) * (1.0 / math.sqrt(hs))
        aff = jnp.where(mask == 0.0, -jnp.inf, aff)
        p = jax.nn.softmax(aff, axis=-1)
        outs.append(p @ v)
    out = jnp.concatenate(outs, axis=2)
    return out @ w_proj.T


if __name__ == "__main__":
    # GPTConfig-consistent small shapes: block_size=T=8, n_embd=32, n_head=4, bias=False
    B, T, C, n_head = 2, 8, 32, 4

    key = jax.random.PRNGKey(0)
    kx, ka, kp = jax.random.split(key, 3)
    x = jax.random.normal(kx, (B, T, C), dtype=jnp.float32)
    w_attn = 0.02 * jax.random.normal(ka, (3 * C, C), dtype=jnp.float32)
    w_proj = 0.02 * jax.random.normal(kp, (C, C), dtype=jnp.float32)

    ref = _reference(x, w_attn, w_proj, n_head)

    # f32 matmul-operand path (parity with the f32 PyTorch module; only non-exact
    # op is the EUP approximate reciprocal in the softmax normalization).
    wqkv32, wpt32 = prepare_attention_weights(w_attn, w_proj, n_head,
                                              compute_dtype=jnp.float32)
    out = jax.block_until_ready(causal_self_attention(x, wqkv32, wpt32, n_head))
    assert out.shape == (B, T, C)
    err = float(jnp.max(jnp.abs(out - ref)))
    assert err < 1e-3, err

    # bf16 matmul-operand path (f32 accumulation / softmax): production setting,
    # especially on v5e.
    wqkv16, wpt16 = prepare_attention_weights(w_attn, w_proj, n_head,
                                              compute_dtype=jnp.bfloat16)
    out_bf16 = jax.block_until_ready(causal_self_attention(x, wqkv16, wpt16, n_head))
    err16 = float(jnp.max(jnp.abs(out_bf16 - ref)))
    assert err16 < 2e-2, err16

    print("KERNEL_OK")
</pallas_src>

<mosaic_0001>
module attributes {stable_mosaic.version = 11 : i64} {
  func.func @_attn_kernel(%arg0: i32, %arg1: memref<1x8x32xf32, #tpu.memory_space<vmem>>, %arg2: memref<32x96xf32, #tpu.memory_space<vmem>>, %arg3: memref<32x32xf32, #tpu.memory_space<vmem>>, %arg4: memref<1x8x32xf32, #tpu.memory_space<vmem>>, %arg5: memref<8x96xf32, #tpu.memory_space<vmem>>, %arg6: memref<8x32xf32, #tpu.memory_space<vmem>>) attributes {dimension_semantics = [#tpu.dimension_semantics<parallel>], iteration_bounds = array<i64: 2>, scalar_prefetch = 0 : i64, scratch_operands = 2 : i64, tpu.core_type = #tpu.core_type<tc>, window_params = [{transform_indices = @transform_0, window_bounds = array<i64: 1, 8, 32>}, {pipeline_mode = #tpu.pipeline_mode<synchronous>, transform_indices = @transform_1, window_bounds = array<i64: 32, 96>}, {pipeline_mode = #tpu.pipeline_mode<synchronous>, transform_indices = @transform_2, window_bounds = array<i64: 32, 32>}, {transform_indices = @transform_3, window_bounds = array<i64: 1, 8, 32>}]} {
    %c0 = arith.constant 0 : index
    %c0_0 = arith.constant 0 : index
    %c0_1 = arith.constant 0 : index
    %0 = vector.load %arg1[%c0, %c0_0, %c0_1] : memref<1x8x32xf32, #tpu.memory_space<vmem>>, vector<1x8x32xf32>
    %1 = vector.shape_cast %0 : vector<1x8x32xf32> to vector<8x32xf32>
    %c0_2 = arith.constant 0 : index
    %c0_3 = arith.constant 0 : index
    %2 = vector.load %arg2[%c0_2, %c0_3] : memref<32x96xf32, #tpu.memory_space<vmem>>, vector<32x96xf32>
    %cst = arith.constant dense<0.000000e+00> : vector<8x96xf32>
    %3 = tpu.matmul %1, %2, %cst {dimension_numbers = #tpu.dot_dimension_numbers<[1], [0], [0], [1], [0, 0, 1, 1], [], []>} : vector<8x32xf32>, vector<32x96xf32>, vector<8x96xf32> -> vector<8x96xf32>
    %c0_4 = arith.constant 0 : index
    %c0_5 = arith.constant 0 : index
    %4 = vector.load %arg5[%c0_4, %c0_5] : memref<8x96xf32, #tpu.memory_space<vmem>>, vector<8x96xf32>
    tpu.vector_store %arg5[%c0_4, %c0_5], %3 {strides = array<i32>} : memref<8x96xf32, #tpu.memory_space<vmem>>, vector<8x96xf32>,
    %5 = tpu.iota {dimensions = array<i32: 0>} : vector<8x8xi32>
    %6 = tpu.iota {dimensions = array<i32: 1>} : vector<8x8xi32>
    %7 = arith.subi %6, %5 : vector<8x8xi32>
    %c0_6 = arith.constant 0 : index
    %c0_7 = arith.constant 0 : index
    %8 = vector.load %arg5[%c0_6, %c0_7] : memref<8x96xf32, #tpu.memory_space<vmem>>, vector<8x8xf32>
    %cst_8 = arith.constant 0xFF800000 : f32
    %9 = vector.broadcast %cst_8 : f32 to vector<8x1xf32>
    %cst_9 = arith.constant 0.000000e+00 : f32
    %10 = vector.broadcast %cst_9 : f32 to vector<8x1xf32>
    %cst_10 = arith.constant 0.000000e+00 : f32
    %11 = vector.broadcast %cst_10 : f32 to vector<8x8xf32>
    %c0_11 = arith.constant 0 : index
    %c32 = arith.constant 32 : index
    %12 = vector.load %arg5[%c0_11, %c32] : memref<8x96xf32, #tpu.memory_space<vmem>>, vector<8x8xf32>
    %c0_12 = arith.constant 0 : index
    %c64 = arith.constant 64 : index
    %13 = vector.load %arg5[%c0_12, %c64] : memref<8x96xf32, #tpu.memory_space<vmem>>, vector<8x8xf32>
    %cst_13 = arith.constant dense<0.000000e+00> : vector<8x8xf32>
    %14 = tpu.matmul %8, %12, %cst_13 {dimension_numbers = #tpu.dot_dimension_numbers<[1], [1], [0], [0], [0, 0, 1, 0], [], []>} : vector<8x8xf32>, vector<8x8xf32>, vector<8x8xf32> -> vector<8x8xf32>
    %c0_i32 = arith.constant 0 : i32
    %15 = vector.broadcast %c0_i32 : i32 to vector<8x8xi32>
    %16 = arith.cmpi sle, %7, %15 : vector<8x8xi32>
    %cst_14 = arith.constant 0xFF800000 : f32
    %17 = vector.broadcast %cst_14 : f32 to vector<8x8xf32>
    %18 = arith.select %16, %14, %17 : vector<8x8xi1>, vector<8x8xf32>
    %cst_15 = arith.constant dense<0xFF800000> : vector<8xf32>
    %19 = vector.multi_reduction <maximumf>, %18, %cst_15 [1] : vector<8x8xf32> to vector<8xf32>
    %20 = vector.shape_cast %19 : vector<8xf32> to vector<8x1xf32>
    %21 = arith.maximumf %9, %20 : vector<8x1xf32>
    %22 = arith.subf %9, %21 : vector<8x1xf32>
    %23 = math.exp %22 : vector<8x1xf32>
    %24 = vector.broadcast %21 : vector<8x1xf32> to vector<8x8xf32>
    %25 = arith.subf %18, %24 : vector<8x8xf32>
    %26 = math.exp %25 : vector<8x8xf32>
    %27 = arith.mulf %23, %10 : vector<8x1xf32>
    %cst_16 = arith.constant dense<0.000000e+00> : vector<8xf32>
    %28 = vector.multi_reduction <add>, %26, %cst_16 [1] : vector<8x8xf32> to vector<8xf32>
    %29 = vector.shape_cast %28 : vector<8xf32> to vector<8x1xf32>
    %30 = arith.addf %27, %29 : vector<8x1xf32>
    %31 = vector.broadcast %23 : vector<8x1xf32> to vector<8x8xf32>
    %32 = arith.mulf %31, %11 : vector<8x8xf32>
    %cst_17 = arith.constant dense<0.000000e+00> : vector<8x8xf32>
    %33 = tpu.matmul %26, %13, %cst_17 {dimension_numbers = #tpu.dot_dimension_numbers<[1], [0], [0], [1], [0, 0, 1, 1], [], []>} : vector<8x8xf32>, vector<8x8xf32>, vector<8x8xf32> -> vector<8x8xf32>
    %34 = arith.addf %32, %33 : vector<8x8xf32>
    %35 = tpu.reciprocal %30 {approx = true} : vector<8x1xf32> -> vector<8x1xf32>
    %36 = vector.broadcast %35 : vector<8x1xf32> to vector<8x8xf32>
    %37 = arith.mulf %34, %36 : vector<8x8xf32>
    %c0_18 = arith.constant 0 : index
    %c8 = arith.constant 8 : index
    %38 = vector.load %arg5[%c0_18, %c8] : memref<8x96xf32, #tpu.memory_space<vmem>>, vector<8x8xf32>
    %cst_19 = arith.constant 0xFF800000 : f32
    %39 = vector.broadcast %cst_19 : f32 to vector<8x1xf32>
    %cst_20 = arith.constant 0.000000e+00 : f32
    %40 = vector.broadcast %cst_20 : f32 to vector<8x1xf32>
    %cst_21 = arith.constant 0.000000e+00 : f32
    %41 = vector.broadcast %cst_21 : f32 to vector<8x8xf32>
    %c0_22 = arith.constant 0 : index
    %c40 = arith.constant 40 : index
    %42 = vector.load %arg5[%c0_22, %c40] : memref<8x96xf32, #tpu.memory_space<vmem>>, vector<8x8xf32>
    %c0_23 = arith.constant 0 : index
    %c72 = arith.constant 72 : index
    %43 = vector.load %arg5[%c0_23, %c72] : memref<8x96xf32, #tpu.memory_space<vmem>>, vector<8x8xf32>
    %cst_24 = arith.constant dense<0.000000e+00> : vector<8x8xf32>
    %44 = tpu.matmul %38, %42, %cst_24 {dimension_numbers = #tpu.dot_dimension_numbers<[1], [1], [0], [0], [0, 0, 1, 0], [], []>} : vector<8x8xf32>, vector<8x8xf32>, vector<8x8xf32> -> vector<8x8xf32>
    %c0_i32_25 = arith.constant 0 : i32
    %45 = vector.broadcast %c0_i32_25 : i32 to vector<8x8xi32>
    %46 = arith.cmpi sle, %7, %45 : vector<8x8xi32>
    %cst_26 = arith.constant 0xFF800000 : f32
    %47 = vector.broadcast %cst_26 : f32 to vector<8x8xf32>
    %48 = arith.select %46, %44, %47 : vector<8x8xi1>, vector<8x8xf32>
    %cst_27 = arith.constant dense<0xFF800000> : vector<8xf32>
    %49 = vector.multi_reduction <maximumf>, %48, %cst_27 [1] : vector<8x8xf32> to vector<8xf32>
    %50 = vector.shape_cast %49 : vector<8xf32> to vector<8x1xf32>
    %51 = arith.maximumf %39, %50 : vector<8x1xf32>
    %52 = arith.subf %39, %51 : vector<8x1xf32>
    %53 = math.exp %52 : vector<8x1xf32>
    %54 = vector.broadcast %51 : vector<8x1xf32> to vector<8x8xf32>
    %55 = arith.subf %48, %54 : vector<8x8xf32>
    %56 = math.exp %55 : vector<8x8xf32>
    %57 = arith.mulf %53, %40 : vector<8x1xf32>
    %cst_28 = arith.constant dense<0.000000e+00> : vector<8xf32>
    %58 = vector.multi_reduction <add>, %56, %cst_28 [1] : vector<8x8xf32> to vector<8xf32>
    %59 = vector.shape_cast %58 : vector<8xf32> to vector<8x1xf32>
    %60 = arith.addf %57, %59 : vector<8x1xf32>
    %61 = vector.broadcast %53 : vector<8x1xf32> to vector<8x8xf32>
    %62 = arith.mulf %61, %41 : vector<8x8xf32>
    %cst_29 = arith.constant dense<0.000000e+00> : vector<8x8xf32>
    %63 = tpu.matmul %56, %43, %cst_29 {dimension_numbers = #tpu.dot_dimension_numbers<[1], [0], [0], [1], [0, 0, 1, 1], [], []>} : vector<8x8xf32>, vector<8x8xf32>, vector<8x8xf32> -> vector<8x8xf32>
    %64 = arith.addf %62, %63 : vector<8x8xf32>
    %65 = tpu.reciprocal %60 {approx = true} : vector<8x1xf32> -> vector<8x1xf32>
    %66 = vector.broadcast %65 : vector<8x1xf32> to vector<8x8xf32>
    %67 = arith.mulf %64, %66 : vector<8x8xf32>
    %c0_30 = arith.constant 0 : index
    %c16 = arith.constant 16 : index
    %68 = vector.load %arg5[%c0_30, %c16] : memref<8x96xf32, #tpu.memory_space<vmem>>, vector<8x8xf32>
    %cst_31 = arith.constant 0xFF800000 : f32
    %69 = vector.broadcast %cst_31 : f32 to vector<8x1xf32>
    %cst_32 = arith.constant 0.000000e+00 : f32
    %70 = vector.broadcast %cst_32 : f32 to vector<8x1xf32>
    %cst_33 = arith.constant 0.000000e+00 : f32
    %71 = vector.broadcast %cst_33 : f32 to vector<8x8xf32>
    %c0_34 = arith.constant 0 : index
    %c48 = arith.constant 48 : index
    %72 = vector.load %arg5[%c0_34, %c48] : memref<8x96xf32, #tpu.memory_space<vmem>>, vector<8x8xf32>
    %c0_35 = arith.constant 0 : index
    %c80 = arith.constant 80 : index
    %73 = vector.load %arg5[%c0_35, %c80] : memref<8x96xf32, #tpu.memory_space<vmem>>, vector<8x8xf32>
    %cst_36 = arith.constant dense<0.000000e+00> : vector<8x8xf32>
    %74 = tpu.matmul %68, %72, %cst_36 {dimension_numbers = #tpu.dot_dimension_numbers<[1], [1], [0], [0], [0, 0, 1, 0], [], []>} : vector<8x8xf32>, vector<8x8xf32>, vector<8x8xf32> -> vector<8x8xf32>
    %c0_i32_37 = arith.constant 0 : i32
    %75 = vector.broadcast %c0_i32_37 : i32 to vector<8x8xi32>
    %76 = arith.cmpi sle, %7, %75 : vector<8x8xi32>
    %cst_38 = arith.constant 0xFF800000 : f32
    %77 = vector.broadcast %cst_38 : f32 to vector<8x8xf32>
    %78 = arith.select %76, %74, %77 : vector<8x8xi1>, vector<8x8xf32>
    %cst_39 = arith.constant dense<0xFF800000> : vector<8xf32>
    %79 = vector.multi_reduction <maximumf>, %78, %cst_39 [1] : vector<8x8xf32> to vector<8xf32>
    %80 = vector.shape_cast %79 : vector<8xf32> to vector<8x1xf32>
    %81 = arith.maximumf %69, %80 : vector<8x1xf32>
    %82 = arith.subf %69, %81 : vector<8x1xf32>
    %83 = math.exp %82 : vector<8x1xf32>
    %84 = vector.broadcast %81 : vector<8x1xf32> to vector<8x8xf32>
    %85 = arith.subf %78, %84 : vector<8x8xf32>
    %86 = math.exp %85 : vector<8x8xf32>
    %87 = arith.mulf %83, %70 : vector<8x1xf32>
    %cst_40 = arith.constant dense<0.000000e+00> : vector<8xf32>
    %88 = vector.multi_reduction <add>, %86, %cst_40 [1] : vector<8x8xf32> to vector<8xf32>
    %89 = vector.shape_cast %88 : vector<8xf32> to vector<8x1xf32>
    %90 = arith.addf %87, %89 : vector<8x1xf32>
    %91 = vector.broadcast %83 : vector<8x1xf32> to vector<8x8xf32>
    %92 = arith.mulf %91, %71 : vector<8x8xf32>
    %cst_41 = arith.constant dense<0.000000e+00> : vector<8x8xf32>
    %93 = tpu.matmul %86, %73, %cst_41 {dimension_numbers = #tpu.dot_dimension_numbers<[1], [0], [0], [1], [0, 0, 1, 1], [], []>} : vector<8x8xf32>, vector<8x8xf32>, vector<8x8xf32> -> vector<8x8xf32>
    %94 = arith.addf %92, %93 : vector<8x8xf32>
    %95 = tpu.reciprocal %90 {approx = true} : vector<8x1xf32> -> vector<8x1xf32>
    %96 = vector.broadcast %95 : vector<8x1xf32> to vector<8x8xf32>
    %97 = arith.mulf %94, %96 : vector<8x8xf32>
    %c0_42 = arith.constant 0 : index
    %c24 = arith.constant 24 : index
    %98 = vector.load %arg5[%c0_42, %c24] : memref<8x96xf32, #tpu.memory_space<vmem>>, vector<8x8xf32>
    %cst_43 = arith.constant 0xFF800000 : f32
    %99 = vector.broadcast %cst_43 : f32 to vector<8x1xf32>
    %cst_44 = arith.constant 0.000000e+00 : f32
    %100 = vector.broadcast %cst_44 : f32 to vector<8x1xf32>
    %cst_45 = arith.constant 0.000000e+00 : f32
    %101 = vector.broadcast %cst_45 : f32 to vector<8x8xf32>
    %c0_46 = arith.constant 0 : index
    %c56 = arith.constant 56 : index
    %102 = vector.load %arg5[%c0_46, %c56] : memref<8x96xf32, #tpu.memory_space<vmem>>, vector<8x8xf32>
    %c0_47 = arith.constant 0 : index
    %c88 = arith.constant 88 : index
    %103 = vector.load %arg5[%c0_47, %c88] : memref<8x96xf32, #tpu.memory_space<vmem>>, vector<8x8xf32>
    %cst_48 = arith.constant dense<0.000000e+00> : vector<8x8xf32>
    %104 = tpu.matmul %98, %102, %cst_48 {dimension_numbers = #tpu.dot_dimension_numbers<[1], [1], [0], [0], [0, 0, 1, 0], [], []>} : vector<8x8xf32>, vector<8x8xf32>, vector<8x8xf32> -> vector<8x8xf32>
    %c0_i32_49 = arith.constant 0 : i32
    %105 = vector.broadcast %c0_i32_49 : i32 to vector<8x8xi32>
    %106 = arith.cmpi sle, %7, %105 : vector<8x8xi32>
    %cst_50 = arith.constant 0xFF800000 : f32
    %107 = vector.broadcast %cst_50 : f32 to vector<8x8xf32>
    %108 = arith.select %106, %104, %107 : vector<8x8xi1>, vector<8x8xf32>
    %cst_51 = arith.constant dense<0xFF800000> : vector<8xf32>
    %109 = vector.multi_reduction <maximumf>, %108, %cst_51 [1] : vector<8x8xf32> to vector<8xf32>
    %110 = vector.shape_cast %109 : vector<8xf32> to vector<8x1xf32>
    %111 = arith.maximumf %99, %110 : vector<8x1xf32>
    %112 = arith.subf %99, %111 : vector<8x1xf32>
    %113 = math.exp %112 : vector<8x1xf32>
    %114 = vector.broadcast %111 : vector<8x1xf32> to vector<8x8xf32>
    %115 = arith.subf %108, %114 : vector<8x8xf32>
    %116 = math.exp %115 : vector<8x8xf32>
    %117 = arith.mulf %113, %100 : vector<8x1xf32>
    %cst_52 = arith.constant dense<0.000000e+00> : vector<8xf32>
    %118 = vector.multi_reduction <add>, %116, %cst_52 [1] : vector<8x8xf32> to vector<8xf32>
    %119 = vector.shape_cast %118 : vector<8xf32> to vector<8x1xf32>
    %120 = arith.addf %117, %119 : vector<8x1xf32>
    %121 = vector.broadcast %113 : vector<8x1xf32> to vector<8x8xf32>
    %122 = arith.mulf %121, %101 : vector<8x8xf32>
    %cst_53 = arith.constant dense<0.000000e+00> : vector<8x8xf32>
    %123 = tpu.matmul %116, %103, %cst_53 {dimension_numbers = #tpu.dot_dimension_numbers<[1], [0], [0], [1], [0, 0, 1, 1], [], []>} : vector<8x8xf32>, vector<8x8xf32>, vector<8x8xf32> -> vector<8x8xf32>
    %124 = arith.addf %122, %123 : vector<8x8xf32>
    %125 = tpu.reciprocal %120 {approx = true} : vector<8x1xf32> -> vector<8x1xf32>
    %126 = vector.broadcast %125 : vector<8x1xf32> to vector<8x8xf32>
    %127 = arith.mulf %124, %126 : vector<8x8xf32>
    %128 = tpu.concatenate %37, %67, %97, %127 in 1 : vector<8x8xf32>, vector<8x8xf32>, vector<8x8xf32>, vector<8x8xf32> -> vector<8x32xf32>
    %c0_54 = arith.constant 0 : index
    %c0_55 = arith.constant 0 : index
    %129 = vector.load %arg6[%c0_54, %c0_55] : memref<8x32xf32, #tpu.memory_space<vmem>>, vector<8x32xf32>
    tpu.vector_store %arg6[%c0_54, %c0_55], %128 {strides = array<i32>} : memref<8x32xf32, #tpu.memory_space<vmem>>, vector<8x32xf32>,
    %c0_56 = arith.constant 0 : index
    %c0_57 = arith.constant 0 : index
    %130 = vector.load %arg6[%c0_56, %c0_57] : memref<8x32xf32, #tpu.memory_space<vmem>>, vector<8x32xf32>
    %c0_58 = arith.constant 0 : index
    %c0_59 = arith.constant 0 : index
    %131 = vector.load %arg3[%c0_58, %c0_59] : memref<32x32xf32, #tpu.memory_space<vmem>>, vector<32x32xf32>
    %cst_60 = arith.constant dense<0.000000e+00> : vector<8x32xf32>
    %132 = tpu.matmul %130, %131, %cst_60 {dimension_numbers = #tpu.dot_dimension_numbers<[1], [0], [0], [1], [0, 0, 1, 1], [], []>} : vector<8x32xf32>, vector<32x32xf32>, vector<8x32xf32> -> vector<8x32xf32>
    %c0_61 = arith.constant 0 : index
    %c0_62 = arith.constant 0 : index
    %c0_63 = arith.constant 0 : index
    %133 = vector.load %arg4[%c0_61, %c0_62, %c0_63] : memref<1x8x32xf32, #tpu.memory_space<vmem>>, vector<1x8x32xf32>
    %134 = vector.shape_cast %133 : vector<1x8x32xf32> to vector<8x32xf32>
    %135 = vector.shape_cast %132 : vector<8x32xf32> to vector<1x8x32xf32>
    tpu.vector_store %arg4[%c0_61, %c0_62, %c0_63], %135 {strides = array<i32>} : memref<1x8x32xf32, #tpu.memory_space<vmem>>, vector<1x8x32xf32>,
    return
  }
  func.func @transform_0(%arg0: i32) -> (i32, i32, i32) {
    %c0_i32 = arith.constant 0 : i32
    %c0_i32_0 = arith.constant 0 : i32
    %c0_i32_1 = arith.constant 0 : i32
    return %arg0, %c0_i32, %c0_i32_0 : i32, i32, i32
  }
  func.func @transform_1(%arg0: i32) -> (i32, i32) {
    %c0_i32 = arith.constant 0 : i32
    %c0_i32_0 = arith.constant 0 : i32
    %c0_i32_1 = arith.constant 0 : i32
    return %c0_i32, %c0_i32_0 : i32, i32
  }
  func.func @transform_2(%arg0: i32) -> (i32, i32) {
    %c0_i32 = arith.constant 0 : i32
    %c0_i32_0 = arith.constant 0 : i32
    %c0_i32_1 = arith.constant 0 : i32
    return %c0_i32, %c0_i32_0 : i32, i32
  }
  func.func @transform_3(%arg0: i32) -> (i32, i32, i32) {
    %c0_i32 = arith.constant 0 : i32
    %c0_i32_0 = arith.constant 0 : i32
    %c0_i32_1 = arith.constant 0 : i32
    return %arg0, %c0_i32, %c0_i32_0 : i32, i32, i32
  }
}

module attributes {stable_mosaic.version = 11 : i64} {
  func.func @_attn_kernel(%arg0: i32, %arg1: memref<1x8x32xf32, #tpu.memory_space<vmem>>, %arg2: memref<32x96xf32, #tpu.memory_space<vmem>>, %arg3: memref<32x32xf32, #tpu.memory_space<vmem>>, %arg4: memref<1x8x32xf32, #tpu.memory_space<vmem>>, %arg5: memref<8x96xf32, #tpu.memory_space<vmem>>, %arg6: memref<8x32xf32, #tpu.memory_space<vmem>>) attributes {dimension_semantics = [#tpu.dimension_semantics<parallel>], iteration_bounds = array<i64: 2>, scalar_prefetch = 0 : i64, scratch_operands = 2 : i64, tpu.core_type = #tpu.core_type<tc>, window_params = [{transform_indices = @transform_0, window_bounds = array<i64: 1, 8, 32>}, {pipeline_mode = #tpu.pipeline_mode<synchronous>, transform_indices = @transform_1, window_bounds = array<i64: 32, 96>}, {pipeline_mode = #tpu.pipeline_mode<synchronous>, transform_indices = @transform_2, window_bounds = array<i64: 32, 32>}, {transform_indices = @transform_3, window_bounds = array<i64: 1, 8, 32>}]} {
    %c0 = arith.constant 0 : index
    %c0_0 = arith.constant 0 : index
    %c0_1 = arith.constant 0 : index
    %0 = vector.load %arg1[%c0, %c0_0, %c0_1] : memref<1x8x32xf32, #tpu.memory_space<vmem>>, vector<1x8x32xf32>
    %1 = vector.shape_cast %0 : vector<1x8x32xf32> to vector<8x32xf32>
    %c0_2 = arith.constant 0 : index
    %c0_3 = arith.constant 0 : index
    %2 = vector.load %arg2[%c0_2, %c0_3] : memref<32x96xf32, #tpu.memory_space<vmem>>, vector<32x96xf32>
    %cst = arith.constant dense<0.000000e+00> : vector<8x96xf32>
    %3 = tpu.matmul %1, %2, %cst {dimension_numbers = #tpu.dot_dimension_numbers<[1], [0], [0], [1], [0, 0, 1, 1], [], []>} : vector<8x32xf32>, vector<32x96xf32>, vector<8x96xf32> -> vector<8x96xf32>
    %c0_4 = arith.constant 0 : index
    %c0_5 = arith.constant 0 : index
    %4 = vector.load %arg5[%c0_4, %c0_5] : memref<8x96xf32, #tpu.memory_space<vmem>>, vector<8x96xf32>
    tpu.vector_store %arg5[%c0_4, %c0_5], %3 {strides = array<i32>} : memref<8x96xf32, #tpu.memory_space<vmem>>, vector<8x96xf32>,
    %5 = tpu.iota {dimensions = array<i32: 0>} : vector<8x8xi32>
    %6 = tpu.iota {dimensions = array<i32: 1>} : vector<8x8xi32>
    %7 = arith.subi %6, %5 : vector<8x8xi32>
    %c0_6 = arith.constant 0 : index
    %c0_7 = arith.constant 0 : index
    %8 = vector.load %arg5[%c0_6, %c0_7] : memref<8x96xf32, #tpu.memory_space<vmem>>, vector<8x8xf32>
    %cst_8 = arith.constant 0xFF800000 : f32
    %9 = vector.broadcast %cst_8 : f32 to vector<8x1xf32>
    %cst_9 = arith.constant 0.000000e+00 : f32
    %10 = vector.broadcast %cst_9 : f32 to vector<8x1xf32>
    %cst_10 = arith.constant 0.000000e+00 : f32
    %11 = vector.broadcast %cst_10 : f32 to vector<8x8xf32>
    %c0_11 = arith.constant 0 : index
    %c32 = arith.constant 32 : index
    %12 = vector.load %arg5[%c0_11, %c32] : memref<8x96xf32, #tpu.memory_space<vmem>>, vector<8x8xf32>
    %c0_12 = arith.constant 0 : index
    %c64 = arith.constant 64 : index
    %13 = vector.load %arg5[%c0_12, %c64] : memref<8x96xf32, #tpu.memory_space<vmem>>, vector<8x8xf32>
    %cst_13 = arith.constant dense<0.000000e+00> : vector<8x8xf32>
    %14 = tpu.matmul %8, %12, %cst_13 {dimension_numbers = #tpu.dot_dimension_numbers<[1], [1], [0], [0], [0, 0, 1, 0], [], []>} : vector<8x8xf32>, vector<8x8xf32>, vector<8x8xf32> -> vector<8x8xf32>
    %c0_i32 = arith.constant 0 : i32
    %15 = vector.broadcast %c0_i32 : i32 to vector<8x8xi32>
    %16 = arith.cmpi sle, %7, %15 : vector<8x8xi32>
    %cst_14 = arith.constant 0xFF800000 : f32
    %17 = vector.broadcast %cst_14 : f32 to vector<8x8xf32>
    %18 = arith.select %16, %14, %17 : vector<8x8xi1>, vector<8x8xf32>
    %cst_15 = arith.constant dense<0xFF800000> : vector<8xf32>
    %19 = vector.multi_reduction <maximumf>, %18, %cst_15 [1] : vector<8x8xf32> to vector<8xf32>
    %20 = vector.shape_cast %19 : vector<8xf32> to vector<8x1xf32>
    %21 = arith.maximumf %9, %20 : vector<8x1xf32>
    %22 = arith.subf %9, %21 : vector<8x1xf32>
    %23 = math.exp %22 : vector<8x1xf32>
    %24 = vector.broadcast %21 : vector<8x1xf32> to vector<8x8xf32>
    %25 = arith.subf %18, %24 : vector<8x8xf32>
    %26 = math.exp %25 : vector<8x8xf32>
    %27 = arith.mulf %23, %10 : vector<8x1xf32>
    %cst_16 = arith.constant dense<0.000000e+00> : vector<8xf32>
    %28 = vector.multi_reduction <add>, %26, %cst_16 [1] : vector<8x8xf32> to vector<8xf32>
    %29 = vector.shape_cast %28 : vector<8xf32> to vector<8x1xf32>
    %30 = arith.addf %27, %29 : vector<8x1xf32>
    %31 = vector.broadcast %23 : vector<8x1xf32> to vector<8x8xf32>
    %32 = arith.mulf %31, %11 : vector<8x8xf32>
    %cst_17 = arith.constant dense<0.000000e+00> : vector<8x8xf32>
    %33 = tpu.matmul %26, %13, %cst_17 {dimension_numbers = #tpu.dot_dimension_numbers<[1], [0], [0], [1], [0, 0, 1, 1], [], []>} : vector<8x8xf32>, vector<8x8xf32>, vector<8x8xf32> -> vector<8x8xf32>
    %34 = arith.addf %32, %33 : vector<8x8xf32>
    %35 = tpu.reciprocal %30 {approx = true} : vector<8x1xf32> -> vector<8x1xf32>
    %36 = vector.broadcast %35 : vector<8x1xf32> to vector<8x8xf32>
    %37 = arith.mulf %34, %36 : vector<8x8xf32>
    %c0_18 = arith.constant 0 : index
    %c8 = arith.constant 8 : index
    %38 = vector.load %arg5[%c0_18, %c8] : memref<8x96xf32, #tpu.memory_space<vmem>>, vector<8x8xf32>
    %cst_19 = arith.constant 0xFF800000 : f32
    %39 = vector.broadcast %cst_19 : f32 to vector<8x1xf32>
    %cst_20 = arith.constant 0.000000e+00 : f32
    %40 = vector.broadcast %cst_20 : f32 to vector<8x1xf32>
    %cst_21 = arith.constant 0.000000e+00 : f32
    %41 = vector.broadcast %cst_21 : f32 to vector<8x8xf32>
    %c0_22 = arith.constant 0 : index
    %c40 = arith.constant 40 : index
    %42 = vector.load %arg5[%c0_22, %c40] : memref<8x96xf32, #tpu.memory_space<vmem>>, vector<8x8xf32>
    %c0_23 = arith.constant 0 : index
    %c72 = arith.constant 72 : index
    %43 = vector.load %arg5[%c0_23, %c72] : memref<8x96xf32, #tpu.memory_space<vmem>>, vector<8x8xf32>
    %cst_24 = arith.constant dense<0.000000e+00> : vector<8x8xf32>
    %44 = tpu.matmul %38, %42, %cst_24 {dimension_numbers = #tpu.dot_dimension_numbers<[1], [1], [0], [0], [0, 0, 1, 0], [], []>} : vector<8x8xf32>, vector<8x8xf32>, vector<8x8xf32> -> vector<8x8xf32>
    %c0_i32_25 = arith.constant 0 : i32
    %45 = vector.broadcast %c0_i32_25 : i32 to vector<8x8xi32>
    %46 = arith.cmpi sle, %7, %45 : vector<8x8xi32>
    %cst_26 = arith.constant 0xFF800000 : f32
    %47 = vector.broadcast %cst_26 : f32 to vector<8x8xf32>
    %48 = arith.select %46, %44, %47 : vector<8x8xi1>, vector<8x8xf32>
    %cst_27 = arith.constant dense<0xFF800000> : vector<8xf32>
    %49 = vector.multi_reduction <maximumf>, %48, %cst_27 [1] : vector<8x8xf32> to vector<8xf32>
    %50 = vector.shape_cast %49 : vector<8xf32> to vector<8x1xf32>
    %51 = arith.maximumf %39, %50 : vector<8x1xf32>
    %52 = arith.subf %39, %51 : vector<8x1xf32>
    %53 = math.exp %52 : vector<8x1xf32>
    %54 = vector.broadcast %51 : vector<8x1xf32> to vector<8x8xf32>
    %55 = arith.subf %48, %54 : vector<8x8xf32>
    %56 = math.exp %55 : vector<8x8xf32>
    %57 = arith.mulf %53, %40 : vector<8x1xf32>
    %cst_28 = arith.constant dense<0.000000e+00> : vector<8xf32>
    %58 = vector.multi_reduction <add>, %56, %cst_28 [1] : vector<8x8xf32> to vector<8xf32>
    %59 = vector.shape_cast %58 : vector<8xf32> to vector<8x1xf32>
    %60 = arith.addf %57, %59 : vector<8x1xf32>
    %61 = vector.broadcast %53 : vector<8x1xf32> to vector<8x8xf32>
    %62 = arith.mulf %61, %41 : vector<8x8xf32>
    %cst_29 = arith.constant dense<0.000000e+00> : vector<8x8xf32>
    %63 = tpu.matmul %56, %43, %cst_29 {dimension_numbers = #tpu.dot_dimension_numbers<[1], [0], [0], [1], [0, 0, 1, 1], [], []>} : vector<8x8xf32>, vector<8x8xf32>, vector<8x8xf32> -> vector<8x8xf32>
    %64 = arith.addf %62, %63 : vector<8x8xf32>
    %65 = tpu.reciprocal %60 {approx = true} : vector<8x1xf32> -> vector<8x1xf32>
    %66 = vector.broadcast %65 : vector<8x1xf32> to vector<8x8xf32>
    %67 = arith.mulf %64, %66 : vector<8x8xf32>
    %c0_30 = arith.constant 0 : index
    %c16 = arith.constant 16 : index
    %68 = vector.load %arg5[%c0_30, %c16] : memref<8x96xf32, #tpu.memory_space<vmem>>, vector<8x8xf32>
    %cst_31 = arith.constant 0xFF800000 : f32
    %69 = vector.broadcast %cst_31 : f32 to vector<8x1xf32>
    %cst_32 = arith.constant 0.000000e+00 : f32
    %70 = vector.broadcast %cst_32 : f32 to vector<8x1xf32>
    %cst_33 = arith.constant 0.000000e+00 : f32
    %71 = vector.broadcast %cst_33 : f32 to vector<8x8xf32>
    %c0_34 = arith.constant 0 : index
    %c48 = arith.constant 48 : index
    %72 = vector.load %arg5[%c0_34, %c48] : memref<8x96xf32, #tpu.memory_space<vmem>>, vector<8x8xf32>
    %c0_35 = arith.constant 0 : index
    %c80 = arith.constant 80 : index
    %73 = vector.load %arg5[%c0_35, %c80] : memref<8x96xf32, #tpu.memory_space<vmem>>, vector<8x8xf32>
    %cst_36 = arith.constant dense<0.000000e+00> : vector<8x8xf32>
    %74 = tpu.matmul %68, %72, %cst_36 {dimension_numbers = #tpu.dot_dimension_numbers<[1], [1], [0], [0], [0, 0, 1, 0], [], []>} : vector<8x8xf32>, vector<8x8xf32>, vector<8x8xf32> -> vector<8x8xf32>
    %c0_i32_37 = arith.constant 0 : i32
    %75 = vector.broadcast %c0_i32_37 : i32 to vector<8x8xi32>
    %76 = arith.cmpi sle, %7, %75 : vector<8x8xi32>
    %cst_38 = arith.constant 0xFF800000 : f32
    %77 = vector.broadcast %cst_38 : f32 to vector<8x8xf32>
    %78 = arith.select %76, %74, %77 : vector<8x8xi1>, vector<8x8xf32>
    %cst_39 = arith.constant dense<0xFF800000> : vector<8xf32>
    %79 = vector.multi_reduction <maximumf>, %78, %cst_39 [1] : vector<8x8xf32> to vector<8xf32>
    %80 = vector.shape_cast %79 : vector<8xf32> to vector<8x1xf32>
    %81 = arith.maximumf %69, %80 : vector<8x1xf32>
    %82 = arith.subf %69, %81 : vector<8x1xf32>
    %83 = math.exp %82 : vector<8x1xf32>
    %84 = vector.broadcast %81 : vector<8x1xf32> to vector<8x8xf32>
    %85 = arith.subf %78, %84 : vector<8x8xf32>
    %86 = math.exp %85 : vector<8x8xf32>
    %87 = arith.mulf %83, %70 : vector<8x1xf32>
    %cst_40 = arith.constant dense<0.000000e+00> : vector<8xf32>
    %88 = vector.multi_reduction <add>, %86, %cst_40 [1] : vector<8x8xf32> to vector<8xf32>
    %89 = vector.shape_cast %88 : vector<8xf32> to vector<8x1xf32>
    %90 = arith.addf %87, %89 : vector<8x1xf32>
    %91 = vector.broadcast %83 : vector<8x1xf32> to vector<8x8xf32>
    %92 = arith.mulf %91, %71 : vector<8x8xf32>
    %cst_41 = arith.constant dense<0.000000e+00> : vector<8x8xf32>
    %93 = tpu.matmul %86, %73, %cst_41 {dimension_numbers = #tpu.dot_dimension_numbers<[1], [0], [0], [1], [0, 0, 1, 1], [], []>} : vector<8x8xf32>, vector<8x8xf32>, vector<8x8xf32> -> vector<8x8xf32>
    %94 = arith.addf %92, %93 : vector<8x8xf32>
    %95 = tpu.reciprocal %90 {approx = true} : vector<8x1xf32> -> vector<8x1xf32>
    %96 = vector.broadcast %95 : vector<8x1xf32> to vector<8x8xf32>
    %97 = arith.mulf %94, %96 : vector<8x8xf32>
    %c0_42 = arith.constant 0 : index
    %c24 = arith.constant 24 : index
    %98 = vector.load %arg5[%c0_42, %c24] : memref<8x96xf32, #tpu.memory_space<vmem>>, vector<8x8xf32>
    %cst_43 = arith.constant 0xFF800000 : f32
    %99 = vector.broadcast %cst_43 : f32 to vector<8x1xf32>
    %cst_44 = arith.constant 0.000000e+00 : f32
    %100 = vector.broadcast %cst_44 : f32 to vector<8x1xf32>
    %cst_45 = arith.constant 0.000000e+00 : f32
    %101 = vector.broadcast %cst_45 : f32 to vector<8x8xf32>
    %c0_46 = arith.constant 0 : index
    %c56 = arith.constant 56 : index
    %102 = vector.load %arg5[%c0_46, %c56] : memref<8x96xf32, #tpu.memory_space<vmem>>, vector<8x8xf32>
    %c0_47 = arith.constant 0 : index
    %c88 = arith.constant 88 : index
    %103 = vector.load %arg5[%c0_47, %c88] : memref<8x96xf32, #tpu.memory_space<vmem>>, vector<8x8xf32>
    %cst_48 = arith.constant dense<0.000000e+00> : vector<8x8xf32>
    %104 = tpu.matmul %98, %102, %cst_48 {dimension_numbers = #tpu.dot_dimension_numbers<[1], [1], [0], [0], [0, 0, 1, 0], [], []>} : vector<8x8xf32>, vector<8x8xf32>, vector<8x8xf32> -> vector<8x8xf32>
    %c0_i32_49 = arith.constant 0 : i32
    %105 = vector.broadcast %c0_i32_49 : i32 to vector<8x8xi32>
    %106 = arith.cmpi sle, %7, %105 : vector<8x8xi32>
    %cst_50 = arith.constant 0xFF800000 : f32
    %107 = vector.broadcast %cst_50 : f32 to vector<8x8xf32>
    %108 = arith.select %106, %104, %107 : vector<8x8xi1>, vector<8x8xf32>
    %cst_51 = arith.constant dense<0xFF800000> : vector<8xf32>
    %109 = vector.multi_reduction <maximumf>, %108, %cst_51 [1] : vector<8x8xf32> to vector<8xf32>
    %110 = vector.shape_cast %109 : vector<8xf32> to vector<8x1xf32>
    %111 = arith.maximumf %99, %110 : vector<8x1xf32>
    %112 = arith.subf %99, %111 : vector<8x1xf32>
    %113 = math.exp %112 : vector<8x1xf32>
    %114 = vector.broadcast %111 : vector<8x1xf32> to vector<8x8xf32>
    %115 = arith.subf %108, %114 : vector<8x8xf32>
    %116 = math.exp %115 : vector<8x8xf32>
    %117 = arith.mulf %113, %100 : vector<8x1xf32>
    %cst_52 = arith.constant dense<0.000000e+00> : vector<8xf32>
    %118 = vector.multi_reduction <add>, %116, %cst_52 [1] : vector<8x8xf32> to vector<8xf32>
    %119 = vector.shape_cast %118 : vector<8xf32> to vector<8x1xf32>
    %120 = arith.addf %117, %119 : vector<8x1xf32>
    %121 = vector.broadcast %113 : vector<8x1xf32> to vector<8x8xf32>
    %122 = arith.mulf %121, %101 : vector<8x8xf32>
    %cst_53 = arith.constant dense<0.000000e+00> : vector<8x8xf32>
    %123 = tpu.matmul %116, %103, %cst_53 {dimension_numbers = #tpu.dot_dimension_numbers<[1], [0], [0], [1], [0, 0, 1, 1], [], []>} : vector<8x8xf32>, vector<8x8xf32>, vector<8x8xf32> -> vector<8x8xf32>
    %124 = arith.addf %122, %123 : vector<8x8xf32>
    %125 = tpu.reciprocal %120 {approx = true} : vector<8x1xf32> -> vector<8x1xf32>
    %126 = vector.broadcast %125 : vector<8x1xf32> to vector<8x8xf32>
    %127 = arith.mulf %124, %126 : vector<8x8xf32>
    %128 = tpu.concatenate %37, %67, %97, %127 in 1 : vector<8x8xf32>, vector<8x8xf32>, vector<8x8xf32>, vector<8x8xf32> -> vector<8x32xf32>
    %c0_54 = arith.constant 0 : index
    %c0_55 = arith.constant 0 : index
    %129 = vector.load %arg6[%c0_54, %c0_55] : memref<8x32xf32, #tpu.memory_space<vmem>>, vector<8x32xf32>
    tpu.vector_store %arg6[%c0_54, %c0_55], %128 {strides = array<i32>} : memref<8x32xf32, #tpu.memory_space<vmem>>, vector<8x32xf32>,
    %c0_56 = arith.constant 0 : index
    %c0_57 = arith.constant 0 : index
    %130 = vector.load %arg6[%c0_56, %c0_57] : memref<8x32xf32, #tpu.memory_space<vmem>>, vector<8x32xf32>
    %c0_58 = arith.constant 0 : index
    %c0_59 = arith.constant 0 : index
    %131 = vector.load %arg3[%c0_58, %c0_59] : memref<32x32xf32, #tpu.memory_space<vmem>>, vector<32x32xf32>
    %cst_60 = arith.constant dense<0.000000e+00> : vector<8x32xf32>
    %132 = tpu.matmul %130, %131, %cst_60 {dimension_numbers = #tpu.dot_dimension_numbers<[1], [0], [0], [1], [0, 0, 1, 1], [], []>} : vector<8x32xf32>, vector<32x32xf32>, vector<8x32xf32> -> vector<8x32xf32>
    %c0_61 = arith.constant 0 : index
    %c0_62 = arith.constant 0 : index
    %c0_63 = arith.constant 0 : index
    %133 = vector.load %arg4[%c0_61, %c0_62, %c0_63] : memref<1x8x32xf32, #tpu.memory_space<vmem>>, vector<1x8x32xf32>
    %134 = vector.shape_cast %133 : vector<1x8x32xf32> to vector<8x32xf32>
    %135 = vector.shape_cast %132 : vector<8x32xf32> to vector<1x8x32xf32>
    tpu.vector_store %arg4[%c0_61, %c0_62, %c0_63], %135 {strides = array<i32>} : memref<1x8x32xf32, #tpu.memory_space<vmem>>, vector<1x8x32xf32>,
    return
  }
  func.func @transform_0(%arg0: i32) -> (i32, i32, i32) {
    %c0_i32 = arith.constant 0 : i32
    %c0_i32_0 = arith.constant 0 : i32
    %c0_i32_1 = arith.constant 0 : i32
    return %arg0, %c0_i32, %c0_i32_0 : i32, i32, i32
  }
  func.func @transform_1(%arg0: i32) -> (i32, i32) {
    %c0_i32 = arith.constant 0 : i32
    %c0_i32_0 = arith.constant 0 : i32
    %c0_i32_1 = arith.constant 0 : i32
    return %c0_i32, %c0_i32_0 : i32, i32
  }
  func.func @transform_2(%arg0: i32) -> (i32, i32) {
    %c0_i32 = arith.constant 0 : i32
    %c0_i32_0 = arith.constant 0 : i32
    %c0_i32_1 = arith.constant 0 : i32
    return %c0_i32, %c0_i32_0 : i32, i32
  }
  func.func @transform_3(%arg0: i32) -> (i32, i32, i32) {
    %c0_i32 = arith.constant 0 : i32
    %c0_i32_0 = arith.constant 0 : i32
    %c0_i32_1 = arith.constant 0 : i32
    return %arg0, %c0_i32, %c0_i32_0 : i32, i32, i32
  }
}

</mosaic_0001>

<llo_original>
// kernel: tpu_custom_call.1
$region0: #{tpu_custom_call.1}
  #allocation0 [shape = 'u32[]', space=smem, size = 0x4, offset = 0x4, fixed_abs, tag = 'smem constant byte address 0x4 - core index']
  #allocation1 [shape = 'u32[144,128]{1,0:T(1,128)}', space=vmem, size = 0x12000, scoped, tag = 'internal scratch']
  #allocation2 [shape = 'f32[8,96]{1,0:T(8,128)}', space=vmem, size = 0x1000, scoped, tag = 'scratch operand']
  #allocation3 [shape = 'f32[8,32]{1,0:T(8,128)}', space=vmem, size = 0x1000, scoped, tag = 'scratch operand']
  %s0 = inlined_call_operand.hbm [shape: f32[2,8,32], index: 0, kind: input, shape index: {}]
  %s1 = inlined_call_operand.hbm [shape: f32[32,96], index: 1, kind: input, shape index: {}]
  %s2 = inlined_call_operand.hbm [shape: f32[32,32], index: 2, kind: input, shape index: {}]
  %s3 = inlined_call_operand.hbm [shape: f32[2,8,32], index: 3, kind: output, shape index: {}]
  %s4 = sld [smem:[#allocation0]]
  $region57: #{tpu_custom_call.1} parent=0
    _
  %s6 = ssub.s32 1, %s4
  %s7 = scalar_select 0, %s6, %s4
  $region1: #{tpu_custom_call.1} parent=0
    #allocation4 [shape = 'u8[8192]{0}', space=vmem, size = 0x2000, scoped, tag = 'input window, operand 0']
    #allocation5 [shape = 's32[2]{0}', space=sflag, size = 0x8, scoped, tag = 'scoped memory for tpu_custom_call.1']
    #allocation6 [shape = 's32[2]{0}', space=sflag, size = 0x8, scoped, tag = 'scoped memory for tpu_custom_call.1']
    #allocation7 [shape = 'u8[16384]{0}', space=vmem, size = 0x4000, scoped, tag = 'input window, operand 1, single buffered']
    #allocation8 [shape = 's32[1]{0}', space=sflag, size = 0x4, scoped, tag = 'scoped memory for tpu_custom_call.1']
    #allocation9 [shape = 'u8[16384]{0}', space=vmem, size = 0x4000, scoped, tag = 'input window, operand 2, single buffered']
    #allocation10 [shape = 'u8[8192]{0}', space=vmem, size = 0x2000, scoped, tag = 'output window, operand 0']
    %8 = vsyncpa [#allocation5], 0
    %s9 = scalar_lea.sflag [#allocation5], 1
    %10 = vsyncpa %s9, 0
    %11 = vsyncpa [#allocation8], 0
    %12 = vsyncpa [#allocation6], 0
    %s13 = scalar_lea.sflag [#allocation6], 1
    %14 = vsyncpa %s13, 0
    loop: start=0, step=1, limit=4
    $region2: #{tpu_custom_call.1} parent=1 // loop_pre_header
      _
    $region3: #{tpu_custom_call.1} parent=1 // loop_header
      %s16 = sphi 0, %s20
      %p17 = scmp.ge.s32.totalorder %s16, 4
      %s26 = sphi 0, %s28
      %s29 = sphi 0, %s26
      %s30 = sphi 0, %s29
      %s46 = sphi 0, %s30
      %s50 = sphi 0, %s50
      %s52 = sphi 0, %s50
      %s53 = sphi 0, %s52
      %s67 = sphi 0, %s53
      %s71 = sphi 0, %s71
      %s73 = sphi 0, %s71
      %s74 = sphi 0, %s73
      %s88 = sphi 0, %s74
      %s94 = sphi 0, %s96
      %s97 = sphi 0, %s94
      %s98 = sphi 0, %s97
      %s114 = sphi 0, %s98
    $region4: #{tpu_custom_call.1} parent=1 // loop_header_branch
      %19 = sbr.rel (%p17) target = $region8
    $region5: #{tpu_custom_call.1} parent=1 // loop_body
      %s21 = ssub.s32 %s16, 1
      %s22 = ssub.s32 %s16, 2
      %s23 = sadd.s32 %s16, 1
      %s24 = ssub.s32 %s16, %s23
      %p25 = scmp.eq.s32.totalorder %s24, 0
      %s27 = sadd.s32 %s26, 1
      %s28 = scalar_select %p25, %s26, %s27
      %p31 = pneg %p25
      %p32 = scmp.eq.s32.totalorder %s16, 1
      %p33 = por %p31, %p32
      %p34 = scmp.ne.s32.totalorder %s26, %s29
      %p35 = scmp.eq.s32.totalorder %s16, 0
      %p36 = por %p34, %p35
      %p37 = scmp.ne.s32.totalorder %s26, %s29
      %p38 = scmp.eq.s32.totalorder %s21, 1
      %p39 = por %p37, %p38
      %p40 = scmp.ne.s32.totalorder %s29, %s30
      %p41 = scmp.eq.s32.totalorder %s21, 0
      %p42 = por %p40, %p41
      %p43 = scmp.ne.s32.totalorder %s29, %s30
      %p44 = scmp.eq.s32.totalorder %s22, 1
      %p45 = por %p43, %p44
      %p47 = scmp.ne.s32.totalorder %s30, %s46
      %p48 = scmp.eq.s32.totalorder %s22, 0
      %p49 = por %p47, %p48
      %s51 = sadd.s32 %s50, 1
      %p54 = scmp.eq.s32.totalorder %s16, 1
      %p55 = scmp.ne.s32.totalorder %s50, %s52
      %p56 = scmp.eq.s32.totalorder %s16, 0
      %p57 = por %p55, %p56
      %p58 = scmp.ne.s32.totalorder %s50, %s52
      %p59 = scmp.eq.s32.totalorder %s21, 1
      %p60 = por %p58, %p59
      %p61 = scmp.ne.s32.totalorder %s52, %s53
      %p62 = scmp.eq.s32.totalorder %s21, 0
      %p63 = por %p61, %p62
      %p64 = scmp.ne.s32.totalorder %s52, %s53
      %p65 = scmp.eq.s32.totalorder %s22, 1
      %p66 = por %p64, %p65
      %p68 = scmp.ne.s32.totalorder %s53, %s67
      %p69 = scmp.eq.s32.totalorder %s22, 0
      %p70 = por %p68, %p69
      %s72 = sadd.s32 %s71, 1
      %p75 = scmp.eq.s32.totalorder %s16, 1
      %p76 = scmp.ne.s32.totalorder %s71, %s73
      %p77 = scmp.eq.s32.totalorder %s16, 0
      %p78 = por %p76, %p77
      %p79 = scmp.ne.s32.totalorder %s71, %s73
      %p80 = scmp.eq.s32.totalorder %s21, 1
      %p81 = por %p79, %p80
      %p82 = scmp.ne.s32.totalorder %s73, %s74
      %p83 = scmp.eq.s32.totalorder %s21, 0
      %p84 = por %p82, %p83
      %p85 = scmp.ne.s32.totalorder %s73, %s74
      %p86 = scmp.eq.s32.totalorder %s22, 1
      %p87 = por %p85, %p86
      %p89 = scmp.ne.s32.totalorder %s74, %s88
      %p90 = scmp.eq.s32.totalorder %s22, 0
      %p91 = por %p89, %p90
      %s92 = ssub.s32 %s16, %s23
      %p93 = scmp.eq.s32.totalorder %s92, 0
      %s95 = sadd.s32 %s94, 1
      %s96 = scalar_select %p93, %s94, %s95
      %p99 = pneg %p93
      %p100 = scmp.eq.s32.totalorder %s16, 1
      %p101 = por %p99, %p100
      %p102 = scmp.ne.s32.totalorder %s94, %s97
      %p103 = scmp.eq.s32.totalorder %s16, 0
      %p104 = por %p102, %p103
      %p105 = scmp.ne.s32.totalorder %s94, %s97
      %p106 = scmp.eq.s32.totalorder %s21, 1
      %p107 = por %p105, %p106
      %p108 = scmp.ne.s32.totalorder %s97, %s98
      %p109 = scmp.eq.s32.totalorder %s21, 0
      %p110 = por %p108, %p109
      %p111 = scmp.ne.s32.totalorder %s97, %s98
      %p112 = scmp.eq.s32.totalorder %s22, 1
      %p113 = por %p111, %p112
      %p115 = scmp.ne.s32.totalorder %s98, %s114
      %p116 = scmp.eq.s32.totalorder %s22, 0
      %p117 = por %p115, %p116
      %p118 = scmp.le.s32.totalorder 1, %s16
      %p119 = scmp.lt.s32.totalorder %s16, 3
      %p120 = pnand %p118, %p119
      %p121 = pneg %p120
      // Predicated region
      $region9: #{tpu_custom_call.1} parent=5 // pred_check
        _
      $region10: #{tpu_custom_call.1} parent=5 // pred_check_branch
        %123 = sbr.rel (%p120) target = $region12
      $region11: #{tpu_custom_call.1} parent=5 // pred_region
        %s124 = ssub.s32 %s16, 1
        // Predicated region
        $region13: #{tpu_custom_call.1} parent=11 // pred_check
          %p125 = pneg %p63
        $region14: #{tpu_custom_call.1} parent=11 // pred_check_branch
          %127 = sbr.rel (%p125) target = $region16
        $region15: #{tpu_custom_call.1} parent=11 // pred_region
          %s129 = ssub.s32 512, 512
          %130 = vsyncadd [#allocation8], %s129
          %s131 = sshll.u32 [#allocation7], 4
          %s132 = int_to_ptr.vmem [resolvable:$true] %s131
          %137 = dma.hbm_to_vmem [thread:$0]  %s1, 512, %s132, [#allocation8], 128, 128, 8
        $region16: #{tpu_custom_call.1} parent=11 // pred_fallthru
          _
        // Predicated region
        $region17: #{tpu_custom_call.1} parent=11 // pred_check
          %p138 = pneg %p84
        $region18: #{tpu_custom_call.1} parent=11 // pred_check_branch
          %140 = sbr.rel (%p138) target = $region20
        $region19: #{tpu_custom_call.1} parent=11 // pred_region
          %s142 = ssub.s32 512, 512
          %143 = vsyncadd [#allocation8], %s142
          %s144 = sshll.u32 [#allocation9], 4
          %s145 = int_to_ptr.vmem [resolvable:$true] %s144
          %150 = dma.hbm_to_vmem [thread:$0]  %s2, 512, %s145, [#allocation8], 128, 128, 8
        $region20: #{tpu_custom_call.1} parent=11 // pred_fallthru
          _
      $region12: #{tpu_custom_call.1} parent=5 // pred_fallthru
        _
      %p151 = scmp.lt.s32.totalorder %s16, 2
      // Predicated region
      $region21: #{tpu_custom_call.1} parent=5 // pred_check
        %p152 = pneg %p151
      $region22: #{tpu_custom_call.1} parent=5 // pred_check_branch
        %154 = sbr.rel (%p152) target = $region24
      $region23: #{tpu_custom_call.1} parent=5 // pred_region
        // Predicated region
        $region25: #{tpu_custom_call.1} parent=23 // pred_check
          %p155 = pneg %p36
        $region26: #{tpu_custom_call.1} parent=23 // pred_check_branch
          %157 = sbr.rel (%p155) target = $region28
        $region27: #{tpu_custom_call.1} parent=23 // pred_region
          %s158 = sand.u32 %s26, 1
          %s159 = scalar_lea.sflag [#allocation5], %s158
          %s160 = sand.u32 %s26, 1
          %s161 = smul.addr %s160, 8
          %s162 = scalar_lea.vmem [#allocation4], %s161
          %s164 = ssub.s32 128, 128
          %165 = vsyncadd %s159, %s164
          %s166 = smul.addr %s16, 128
          %s167 = scalar_lea.hbm %s0, %s166
          %s169 = sshll.u32 %s162, 4
          %s170 = int_to_ptr.vmem [resolvable:$true] %s169
          %172 = dma.hbm_to_vmem [thread:$0]  %s167, 128, %s170, %s159
        $region28: #{tpu_custom_call.1} parent=23 // pred_fallthru
          _
      $region24: #{tpu_custom_call.1} parent=5 // pred_fallthru
        _
      %p173 = scmp.le.s32.totalorder 1, %s16
      %p174 = scmp.lt.s32.totalorder %s16, 3
      %p175 = pnand %p173, %p174
      %p176 = pneg %p175
      // Predicated region
      $region29: #{tpu_custom_call.1} parent=5 // pred_check
        _
      $region30: #{tpu_custom_call.1} parent=5 // pred_check_branch
        %178 = sbr.rel (%p175) target = $region32
      $region31: #{tpu_custom_call.1} parent=5 // pred_region
        %s179 = ssub.s32 %s16, 1
        %s180 = sand.u32 %s29, 1
        %s181 = scalar_lea.sflag [#allocation5], %s180
        %s182 = sand.u32 %s29, 1
        %s183 = smul.addr %s182, 8
        %s184 = scalar_lea.vmem [#allocation4], %s183
        // Predicated region
        $region33: #{tpu_custom_call.1} parent=31 // pred_check
          %p185 = pneg %p42
        $region34: #{tpu_custom_call.1} parent=31 // pred_check_branch
          %187 = sbr.rel (%p185) target = $region36
        $region35: #{tpu_custom_call.1} parent=31 // pred_region
          %188 = dma.done %s181, 128
        $region36: #{tpu_custom_call.1} parent=31 // pred_fallthru
          _
        // Predicated region
        $region37: #{tpu_custom_call.1} parent=31 // pred_check
          %p189 = pneg %p63
        $region38: #{tpu_custom_call.1} parent=31 // pred_check_branch
          %191 = sbr.rel (%p189) target = $region40
        $region39: #{tpu_custom_call.1} parent=31 // pred_region
          %192 = dma.done [#allocation8], 512
        $region40: #{tpu_custom_call.1} parent=31 // pred_fallthru
          _
        // Predicated region
        $region41: #{tpu_custom_call.1} parent=31 // pred_check
          %p193 = pneg %p84
        $region42: #{tpu_custom_call.1} parent=31 // pred_check_branch
          %195 = sbr.rel (%p193) target = $region44
        $region43: #{tpu_custom_call.1} parent=31 // pred_region
          %196 = dma.done [#allocation8], 512
        $region44: #{tpu_custom_call.1} parent=31 // pred_fallthru
          _
        %s197 = sand.u32 %s29, 1
        %s198 = scalar_lea.sflag [#allocation5], %s197
        %s199 = sand.u32 %s29, 1
        %s200 = smul.addr %s199, 8
        %s201 = scalar_lea.vmem [#allocation4], %s200
        %p202 = pneg %p42
        %p203 = pneg %p39
        %p204 = pneg %p63
        %p205 = pneg %p60
        %p206 = pneg %p84
        %p207 = pneg %p81
        %p208 = pneg %p110
        %p209 = pneg %p107
        %s210 = sand.u32 %s97, 1
        %s211 = scalar_lea.sflag [#allocation6], %s210
        %s212 = sand.u32 %s97, 1
        %s213 = smul.addr %s212, 8
        %s214 = scalar_lea.vmem [#allocation10], %s213
        %v215 = vld [vmem:[%s184] sm:$0xff]
        %v216 = vld [vmem:[#allocation7] sm:$0xff]
        %v217 = vld [vmem:[#allocation7 + $0x8] sm:$0xff]
        %v218 = vld [vmem:[#allocation7 + $0x10] sm:$0xff]
        %v219 = vld [vmem:[#allocation7 + $0x18] sm:$0xff]
        %vm220 = vcmask 261120
        %v222 = vsel %vm220, %v215, 0
        %224 = vmatprep.subr.mxu0 0.0
        %225 = vmatpush1.msra.mxu0 %v216
        %226 = vmatprep.subr.mxu0 0.0
        %227 = vmatpush1.msra.mxu0 %v217
        %228 = vmatprep.subr.mxu0 0.0
        %229 = vmatpush1.msra.mxu0 %v218
        %230 = vmatprep.subr.mxu0 0.0
        %231 = vmatpush1.msra.mxu0 %v219
        %232 = vmatprep.subr.mxu0 0.0
        %233 = vmatpush1.msra.mxu0 0.0
        %234 = vmatprep.subr.mxu0 0.0
        %235 = vmatpush1.msra.mxu0 0.0
        %236 = vmatprep.subr.mxu0 0.0
        %237 = vmatpush1.msra.mxu0 0.0
        %238 = vmatprep.subr.mxu0 0.0
        %239 = vmatpush1.msra.mxu0 0.0
        %240 = vmatprep.subr.mxu0 0.0
        %241 = vmatpush1.msra.mxu0 0.0
        %242 = vmatprep.subr.mxu0 0.0
        %243 = vmatpush1.msra.mxu0 0.0
        %244 = vmatprep.subr.mxu0 0.0
        %245 = vmatpush1.msra.mxu0 0.0
        %246 = vmatprep.subr.mxu0 0.0
        %247 = vmatpush1.msra.mxu0 0.0
        %248 = vmatprep.subr.mxu0 0.0
        %249 = vmatpush1.msra.mxu0 0.0
        %250 = vmatprep.subr.mxu0 0.0
        %251 = vmatpush1.msra.mxu0 0.0
        %252 = vmatprep.subr.mxu0 0.0
        %253 = vmatpush1.msra.mxu0 0.0
        %254 = vmatprep.subr.mxu0 0.0
        %255 = vmatpush1.msra.mxu0 0.0
        %256 = vmatprep.subr.mxu0 0.0
        %257 = vmatpush1.msra.mxu0 0.0
        %258 = vmatprep.subr.mxu0 0.0
        %259 = vmatpush1.msra.mxu0 0.0
        %260 = vmatprep.subr.mxu0 0.0
        %261 = vmatpush1.msra.mxu0 0.0
        %262 = vmatprep.subr.mxu0 0.0
        %263 = vmatpush1.msra.mxu0 0.0
        %264 = vmatprep.subr.mxu0 0.0
        %265 = vmatpush1.msra.mxu0 0.0
        %266 = vmatprep.subr.mxu0 0.0
        %267 = vmatpush1.msra.mxu0 0.0
        %268 = vmatprep.subr.mxu0 0.0
        %269 = vmatpush1.msra.mxu0 0.0
        %270 = vmatprep.subr.mxu0 0.0
        %271 = vmatpush1.msra.mxu0 0.0
        %272 = vmatprep.subr.mxu0 0.0
        %273 = vmatpush1.msra.mxu0 0.0
        %274 = vmatprep.subr.mxu0 0.0
        %275 = vmatpush1.msra.mxu0 0.0
        %276 = vmatprep.subr.mxu0 0.0
        %277 = vmatpush1.msra.mxu0 0.0
        %278 = vmatprep.subr.mxu0 0.0
        %279 = vmatpush1.msra.mxu0 0.0
        %280 = vmatprep.subr.mxu0 0.0
        %281 = vmatpush1.msra.mxu0 0.0
        %282 = vmatprep.subr.mxu0 0.0
        %283 = vmatpush1.msra.mxu0 0.0
        %284 = vmatprep.subr.mxu0 0.0
        %285 = vmatpush1.msra.mxu0 0.0
        %286 = vmatprep.subr.mxu0 0.0
        %287 = vmatpush1.msra.mxu0 0.0
        %288 = vmatprep.mubr.f32.mxu0 0.0
        %289 = vmatmul.mubr.f32.gmra.mrb[0].mxu0 %v222
        %v290 = vpop.f32.mrb[0].mxu0
        %v291 = vadd.f32 0.0, %v290
        %v292 = vpop.f32.mrb[0].mxu0
        %293 = vdwg.mxu0
        %vm294 = vcmask 785408
        %295 = vst.msk [vmem:[#allocation2] sm:$0xff] %vm294, %v291
        %v296 = vlaneseq
        %v297 = vshrl.u32 %v296, 7
        %v298 = vlaneseq
        %v299 = vand.u32 %v298, 127
        %v300 = vsub.s32 %v299, %v297
        %v301 = vld [vmem:[#allocation2] sm:$0xff]
        %303 = vrot.lane.b32.xlu0 %v301, 96
        %v304 = vpop.permute.xlu0 %303
        %vm305 = vcmask 64512
        %v306 = vsel %vm305, %v301, 0
        %v308 = vsel %vm305, %v304, 0
        %310 = vmatprep.subr.mxu0 0.0
        %311 = vmatpush1.xpose.msra.mxu0 %v308
        %312 = vmatprep.subr.mxu0 0.0
        %313 = vmatpush1.xpose.msra.mxu0 0.0
        %314 = vmatprep.subr.mxu0 0.0
        %315 = vmatpush1.xpose.msra.mxu0 0.0
        %316 = vmatprep.subr.mxu0 0.0
        %317 = vmatpush1.xpose.msra.mxu0 0.0
        %318 = vmatprep.subr.mxu0 0.0
        %319 = vmatpush1.xpose.msra.mxu0 0.0
        %320 = vmatprep.subr.mxu0 0.0
        %321 = vmatpush1.xpose.msra.mxu0 0.0
        %322 = vmatprep.subr.mxu0 0.0
        %323 = vmatpush1.xpose.msra.mxu0 0.0
        %324 = vmatprep.subr.mxu0 0.0
        %325 = vmatpush1.xpose.msra.mxu0 0.0
        %326 = vmatprep.subr.mxu0 0.0
        %327 = vmatpush1.xpose.msra.mxu0 0.0
        %328 = vmatprep.subr.mxu0 0.0
        %329 = vmatpush1.xpose.msra.mxu0 0.0
        %330 = vmatprep.subr.mxu0 0.0
        %331 = vmatpush1.xpose.msra.mxu0 0.0
        %332 = vmatprep.subr.mxu0 0.0
        %333 = vmatpush1.xpose.msra.mxu0 0.0
        %334 = vmatprep.subr.mxu0 0.0
        %335 = vmatpush1.xpose.msra.mxu0 0.0
        %336 = vmatprep.subr.mxu0 0.0
        %337 = vmatpush1.xpose.msra.mxu0 0.0
        %338 = vmatprep.subr.mxu0 0.0
        %339 = vmatpush1.xpose.msra.mxu0 0.0
        %340 = vmatprep.subr.mxu0 0.0
        %341 = vmatpush1.xpose.msra.mxu0 0.0
        %342 = vmatprep.subr.mxu0 0.0
        %343 = vmatpush1.xpose.msra.mxu0 0.0
        %344 = vmatprep.subr.mxu0 0.0
        %345 = vmatpush1.xpose.msra.mxu0 0.0
        %346 = vmatprep.subr.mxu0 0.0
        %347 = vmatpush1.xpose.msra.mxu0 0.0
        %348 = vmatprep.subr.mxu0 0.0
        %349 = vmatpush1.xpose.msra.mxu0 0.0
        %350 = vmatprep.subr.mxu0 0.0
        %351 = vmatpush1.xpose.msra.mxu0 0.0
        %352 = vmatprep.subr.mxu0 0.0
        %353 = vmatpush1.xpose.msra.mxu0 0.0
        %354 = vmatprep.subr.mxu0 0.0
        %355 = vmatpush1.xpose.msra.mxu0 0.0
        %356 = vmatprep.subr.mxu0 0.0
        %357 = vmatpush1.xpose.msra.mxu0 0.0
        %358 = vmatprep.subr.mxu0 0.0
        %359 = vmatpush1.xpose.msra.mxu0 0.0
        %360 = vmatprep.subr.mxu0 0.0
        %361 = vmatpush1.xpose.msra.mxu0 0.0
        %362 = vmatprep.subr.mxu0 0.0
        %363 = vmatpush1.xpose.msra.mxu0 0.0
        %364 = vmatprep.subr.mxu0 0.0
        %365 = vmatpush1.xpose.msra.mxu0 0.0
        %366 = vmatprep.subr.mxu0 0.0
        %367 = vmatpush1.xpose.msra.mxu0 0.0
        %368 = vmatprep.subr.mxu0 0.0
        %369 = vmatpush1.xpose.msra.mxu0 0.0
        %370 = vmatprep.subr.mxu0 0.0
        %371 = vmatpush1.xpose.msra.mxu0 0.0
        %372 = vmatprep.subr.mxu0 0.0
        %373 = vmatpush1.xpose.msra.mxu0 0.0
        %374 = vmatprep.mubr.f32.mxu0 0.0
        %375 = vmatmul.mubr.f32.gmra.mrb[0].mxu0 %v306
        %v376 = vpop.f32.mrb[0].mxu0
        %v377 = vadd.f32 0.0, %v376
        %v378 = vpop.f32.mrb[0].mxu0
        %379 = vdwg.mxu0
        %vm380 = vcmp.le.s32.totalorder %v300, 0
        %v381 = vsel %vm380, %v377, -inf
        %v382 = vsel %vm305, %v381, -inf
        %383 = vmax.xlane.f32.xlu0 %v382
        %v384 = vpop.xlane.xlu0 %383
        %v385 = vsub.f32 -inf, %v384
        %v386 = vmul.f32 %v385, 1.442695
        %v387 = vpow.pop %v386
        %v388 = vsub.f32 %v381, %v384
        %v389 = vmul.f32 %v388, 1.442695
        %v390 = vpow.pop %v389
        %v391 = vmul.f32 %v387, 0.0
        %v392 = vsel %vm305, %v390, 0.0
        %393 = vadd.xlane.f32.xlu0 %v392
        %v394 = vpop.xlane.xlu0 %393
        %v395 = vadd.f32 %v391, %v394
        %396 = vrot.lane.b32.xlu0 %v301, 64
        %v397 = vpop.permute.xlu0 %396
        %v400 = vsel %vm305, %v390, 0
        %402 = vmatprep.subr.mxu0 0.0
        %403 = vmatpush1.msra.mxu0 %v397
        %404 = vmatprep.subr.mxu0 0.0
        %405 = vmatpush1.msra.mxu0 0.0
        %406 = vmatprep.subr.mxu0 0.0
        %407 = vmatpush1.msra.mxu0 0.0
        %408 = vmatprep.subr.mxu0 0.0
        %409 = vmatpush1.msra.mxu0 0.0
        %410 = vmatprep.subr.mxu0 0.0
        %411 = vmatpush1.msra.mxu0 0.0
        %412 = vmatprep.subr.mxu0 0.0
        %413 = vmatpush1.msra.mxu0 0.0
        %414 = vmatprep.subr.mxu0 0.0
        %415 = vmatpush1.msra.mxu0 0.0
        %416 = vmatprep.subr.mxu0 0.0
        %417 = vmatpush1.msra.mxu0 0.0
        %418 = vmatprep.subr.mxu0 0.0
        %419 = vmatpush1.msra.mxu0 0.0
        %420 = vmatprep.subr.mxu0 0.0
        %421 = vmatpush1.msra.mxu0 0.0
        %422 = vmatprep.subr.mxu0 0.0
        %423 = vmatpush1.msra.mxu0 0.0
        %424 = vmatprep.subr.mxu0 0.0
        %425 = vmatpush1.msra.mxu0 0.0
        %426 = vmatprep.subr.mxu0 0.0
        %427 = vmatpush1.msra.mxu0 0.0
        %428 = vmatprep.subr.mxu0 0.0
        %429 = vmatpush1.msra.mxu0 0.0
        %430 = vmatprep.subr.mxu0 0.0
        %431 = vmatpush1.msra.mxu0 0.0
        %432 = vmatprep.subr.mxu0 0.0
        %433 = vmatpush1.msra.mxu0 0.0
        %434 = vmatprep.subr.mxu0 0.0
        %435 = vmatpush1.msra.mxu0 0.0
        %436 = vmatprep.subr.mxu0 0.0
        %437 = vmatpush1.msra.mxu0 0.0
        %438 = vmatprep.subr.mxu0 0.0
        %439 = vmatpush1.msra.mxu0 0.0
        %440 = vmatprep.subr.mxu0 0.0
        %441 = vmatpush1.msra.mxu0 0.0
        %442 = vmatprep.subr.mxu0 0.0
        %443 = vmatpush1.msra.mxu0 0.0
        %444 = vmatprep.subr.mxu0 0.0
        %445 = vmatpush1.msra.mxu0 0.0
        %446 = vmatprep.subr.mxu0 0.0
        %447 = vmatpush1.msra.mxu0 0.0
        %448 = vmatprep.subr.mxu0 0.0
        %449 = vmatpush1.msra.mxu0 0.0
        %450 = vmatprep.subr.mxu0 0.0
        %451 = vmatpush1.msra.mxu0 0.0
        %452 = vmatprep.subr.mxu0 0.0
        %453 = vmatpush1.msra.mxu0 0.0
        %454 = vmatprep.subr.mxu0 0.0
        %455 = vmatpush1.msra.mxu0 0.0
        %456 = vmatprep.subr.mxu0 0.0
        %457 = vmatpush1.msra.mxu0 0.0
        %458 = vmatprep.subr.mxu0 0.0
        %459 = vmatpush1.msra.mxu0 0.0
        %460 = vmatprep.subr.mxu0 0.0
        %461 = vmatpush1.msra.mxu0 0.0
        %462 = vmatprep.subr.mxu0 0.0
        %463 = vmatpush1.msra.mxu0 0.0
        %464 = vmatprep.subr.mxu0 0.0
        %465 = vmatpush1.msra.mxu0 0.0
        %466 = vmatprep.mubr.f32.mxu0 0.0
        %467 = vmatmul.mubr.f32.gmra.mrb[0].mxu0 %v400
        %v468 = vpop.f32.mrb[0].mxu0
        %v469 = vadd.f32 0.0, %v468
        %v470 = vpop.f32.mrb[0].mxu0
        %471 = vdwg.mxu0
        %v472 = vadd.f32 %v391, %v469
        %v473 = vrcp.pop %v395
        %v474 = vmul.f32 %v472, %v473
        %475 = vrot.lane.b32.xlu0 %v301, 120
        %v476 = vpop.permute.xlu0 %475
        %477 = vrot.lane.b32.xlu0 %v301, 88
        %v478 = vpop.permute.xlu0 %477
        %v479 = vsel %vm305, %v476, 0
        %v481 = vsel %vm305, %v478, 0
        %483 = vmatprep.subr.mxu0 0.0
        %484 = vmatpush1.xpose.msra.mxu0 %v481
        %485 = vmatprep.subr.mxu0 0.0
        %486 = vmatpush1.xpose.msra.mxu0 0.0
        %487 = vmatprep.subr.mxu0 0.0
        %488 = vmatpush1.xpose.msra.mxu0 0.0
        %489 = vmatprep.subr.mxu0 0.0
        %490 = vmatpush1.xpose.msra.mxu0 0.0
        %491 = vmatprep.subr.mxu0 0.0
        %492 = vmatpush1.xpose.msra.mxu0 0.0
        %493 = vmatprep.subr.mxu0 0.0
        %494 = vmatpush1.xpose.msra.mxu0 0.0
        %495 = vmatprep.subr.mxu0 0.0
        %496 = vmatpush1.xpose.msra.mxu0 0.0
        %497 = vmatprep.subr.mxu0 0.0
        %498 = vmatpush1.xpose.msra.mxu0 0.0
        %499 = vmatprep.subr.mxu0 0.0
        %500 = vmatpush1.xpose.msra.mxu0 0.0
        %501 = vmatprep.subr.mxu0 0.0
        %502 = vmatpush1.xpose.msra.mxu0 0.0
        %503 = vmatprep.subr.mxu0 0.0
        %504 = vmatpush1.xpose.msra.mxu0 0.0
        %505 = vmatprep.subr.mxu0 0.0
        %506 = vmatpush1.xpose.msra.mxu0 0.0
        %507 = vmatprep.subr.mxu0 0.0
        %508 = vmatpush1.xpose.msra.mxu0 0.0
        %509 = vmatprep.subr.mxu0 0.0
        %510 = vmatpush1.xpose.msra.mxu0 0.0
        %511 = vmatprep.subr.mxu0 0.0
        %512 = vmatpush1.xpose.msra.mxu0 0.0
        %513 = vmatprep.subr.mxu0 0.0
        %514 = vmatpush1.xpose.msra.mxu0 0.0
        %515 = vmatprep.subr.mxu0 0.0
        %516 = vmatpush1.xpose.msra.mxu0 0.0
        %517 = vmatprep.subr.mxu0 0.0
        %518 = vmatpush1.xpose.msra.mxu0 0.0
        %519 = vmatprep.subr.mxu0 0.0
        %520 = vmatpush1.xpose.msra.mxu0 0.0
        %521 = vmatprep.subr.mxu0 0.0
        %522 = vmatpush1.xpose.msra.mxu0 0.0
        %523 = vmatprep.subr.mxu0 0.0
        %524 = vmatpush1.xpose.msra.mxu0 0.0
        %525 = vmatprep.subr.mxu0 0.0
        %526 = vmatpush1.xpose.msra.mxu0 0.0
        %527 = vmatprep.subr.mxu0 0.0
        %528 = vmatpush1.xpose.msra.mxu0 0.0
        %529 = vmatprep.subr.mxu0 0.0
        %530 = vmatpush1.xpose.msra.mxu0 0.0
        %531 = vmatprep.subr.mxu0 0.0
        %532 = vmatpush1.xpose.msra.mxu0 0.0
        %533 = vmatprep.subr.mxu0 0.0
        %534 = vmatpush1.xpose.msra.mxu0 0.0
        %535 = vmatprep.subr.mxu0 0.0
        %536 = vmatpush1.xpose.msra.mxu0 0.0
        %537 = vmatprep.subr.mxu0 0.0
        %538 = vmatpush1.xpose.msra.mxu0 0.0
        %539 = vmatprep.subr.mxu0 0.0
        %540 = vmatpush1.xpose.msra.mxu0 0.0
        %541 = vmatprep.subr.mxu0 0.0
        %542 = vmatpush1.xpose.msra.mxu0 0.0
        %543 = vmatprep.subr.mxu0 0.0
        %544 = vmatpush1.xpose.msra.mxu0 0.0
        %545 = vmatprep.subr.mxu0 0.0
        %546 = vmatpush1.xpose.msra.mxu0 0.0
        %547 = vmatprep.mubr.f32.mxu0 0.0
        %548 = vmatmul.mubr.f32.gmra.mrb[0].mxu0 %v479
        %v549 = vpop.f32.mrb[0].mxu0
        %v550 = vadd.f32 0.0, %v549
        %v551 = vpop.f32.mrb[0].mxu0
        %552 = vdwg.mxu0
        %v553 = vsel %vm380, %v550, -inf
        %v554 = vsel %vm305, %v553, -inf
        %555 = vmax.xlane.f32.xlu0 %v554
        %v556 = vpop.xlane.xlu0 %555
        %v557 = vsub.f32 -inf, %v556
        %v558 = vmul.f32 %v557, 1.442695
        %v559 = vpow.pop %v558
        %v560 = vsub.f32 %v553, %v556
        %v561 = vmul.f32 %v560, 1.442695
        %v562 = vpow.pop %v561
        %v563 = vmul.f32 %v559, 0.0
        %v564 = vsel %vm305, %v562, 0.0
        %565 = vadd.xlane.f32.xlu0 %v564
        %v566 = vpop.xlane.xlu0 %565
        %v567 = vadd.f32 %v563, %v566
        %568 = vrot.lane.b32.xlu0 %v301, 56
        %v569 = vpop.permute.xlu0 %568
        %v572 = vsel %vm305, %v562, 0
        %574 = vmatprep.subr.mxu0 0.0
        %575 = vmatpush1.msra.mxu0 %v569
        %576 = vmatprep.subr.mxu0 0.0
        %577 = vmatpush1.msra.mxu0 0.0
        %578 = vmatprep.subr.mxu0 0.0
        %579 = vmatpush1.msra.mxu0 0.0
        %580 = vmatprep.subr.mxu0 0.0
        %581 = vmatpush1.msra.mxu0 0.0
        %582 = vmatprep.subr.mxu0 0.0
        %583 = vmatpush1.msra.mxu0 0.0
        %584 = vmatprep.subr.mxu0 0.0
        %585 = vmatpush1.msra.mxu0 0.0
        %586 = vmatprep.subr.mxu0 0.0
        %587 = vmatpush1.msra.mxu0 0.0
        %588 = vmatprep.subr.mxu0 0.0
        %589 = vmatpush1.msra.mxu0 0.0
        %590 = vmatprep.subr.mxu0 0.0
        %591 = vmatpush1.msra.mxu0 0.0
        %592 = vmatprep.subr.mxu0 0.0
        %593 = vmatpush1.msra.mxu0 0.0
        %594 = vmatprep.subr.mxu0 0.0
        %595 = vmatpush1.msra.mxu0 0.0
        %596 = vmatprep.subr.mxu0 0.0
        %597 = vmatpush1.msra.mxu0 0.0
        %598 = vmatprep.subr.mxu0 0.0
        %599 = vmatpush1.msra.mxu0 0.0
        %600 = vmatprep.subr.mxu0 0.0
        %601 = vmatpush1.msra.mxu0 0.0
        %602 = vmatprep.subr.mxu0 0.0
        %603 = vmatpush1.msra.mxu0 0.0
        %604 = vmatprep.subr.mxu0 0.0
        %605 = vmatpush1.msra.mxu0 0.0
        %606 = vmatprep.subr.mxu0 0.0
        %607 = vmatpush1.msra.mxu0 0.0
        %608 = vmatprep.subr.mxu0 0.0
        %609 = vmatpush1.msra.mxu0 0.0
        %610 = vmatprep.subr.mxu0 0.0
        %611 = vmatpush1.msra.mxu0 0.0
        %612 = vmatprep.subr.mxu0 0.0
        %613 = vmatpush1.msra.mxu0 0.0
        %614 = vmatprep.subr.mxu0 0.0
        %615 = vmatpush1.msra.mxu0 0.0
        %616 = vmatprep.subr.mxu0 0.0
        %617 = vmatpush1.msra.mxu0 0.0
        %618 = vmatprep.subr.mxu0 0.0
        %619 = vmatpush1.msra.mxu0 0.0
        %620 = vmatprep.subr.mxu0 0.0
        %621 = vmatpush1.msra.mxu0 0.0
        %622 = vmatprep.subr.mxu0 0.0
        %623 = vmatpush1.msra.mxu0 0.0
        %624 = vmatprep.subr.mxu0 0.0
        %625 = vmatpush1.msra.mxu0 0.0
        %626 = vmatprep.subr.mxu0 0.0
        %627 = vmatpush1.msra.mxu0 0.0
        %628 = vmatprep.subr.mxu0 0.0
        %629 = vmatpush1.msra.mxu0 0.0
        %630 = vmatprep.subr.mxu0 0.0
        %631 = vmatpush1.msra.mxu0 0.0
        %632 = vmatprep.subr.mxu0 0.0
        %633 = vmatpush1.msra.mxu0 0.0
        %634 = vmatprep.subr.mxu0 0.0
        %635 = vmatpush1.msra.mxu0 0.0
        %636 = vmatprep.subr.mxu0 0.0
        %637 = vmatpush1.msra.mxu0 0.0
        %638 = vmatprep.mubr.f32.mxu0 0.0
        %639 = vmatmul.mubr.f32.gmra.mrb[0].mxu0 %v572
        %v640 = vpop.f32.mrb[0].mxu0
        %v641 = vadd.f32 0.0, %v640
        %v642 = vpop.f32.mrb[0].mxu0
        %643 = vdwg.mxu0
        %v644 = vadd.f32 %v563, %v641
        %v645 = vrcp.pop %v567
        %v646 = vmul.f32 %v644, %v645
        %647 = vrot.lane.b32.xlu0 %v301, 112
        %v648 = vpop.permute.xlu0 %647
        %649 = vrot.lane.b32.xlu0 %v301, 80
        %v650 = vpop.permute.xlu0 %649
        %v651 = vsel %vm305, %v648, 0
        %v653 = vsel %vm305, %v650, 0
        %655 = vmatprep.subr.mxu0 0.0
        %656 = vmatpush1.xpose.msra.mxu0 %v653
        %657 = vmatprep.subr.mxu0 0.0
        %658 = vmatpush1.xpose.msra.mxu0 0.0
        %659 = vmatprep.subr.mxu0 0.0
        %660 = vmatpush1.xpose.msra.mxu0 0.0
        %661 = vmatprep.subr.mxu0 0.0
        %662 = vmatpush1.xpose.msra.mxu0 0.0
        %663 = vmatprep.subr.mxu0 0.0
        %664 = vmatpush1.xpose.msra.mxu0 0.0
        %665 = vmatprep.subr.mxu0 0.0
        %666 = vmatpush1.xpose.msra.mxu0 0.0
        %667 = vmatprep.subr.mxu0 0.0
        %668 = vmatpush1.xpose.msra.mxu0 0.0
        %669 = vmatprep.subr.mxu0 0.0
        %670 = vmatpush1.xpose.msra.mxu0 0.0
        %671 = vmatprep.subr.mxu0 0.0
        %672 = vmatpush1.xpose.msra.mxu0 0.0
        %673 = vmatprep.subr.mxu0 0.0
        %674 = vmatpush1.xpose.msra.mxu0 0.0
        %675 = vmatprep.subr.mxu0 0.0
        %676 = vmatpush1.xpose.msra.mxu0 0.0
        %677 = vmatprep.subr.mxu0 0.0
        %678 = vmatpush1.xpose.msra.mxu0 0.0
        %679 = vmatprep.subr.mxu0 0.0
        %680 = vmatpush1.xpose.msra.mxu0 0.0
        %681 = vmatprep.subr.mxu0 0.0
        %682 = vmatpush1.xpose.msra.mxu0 0.0
        %683 = vmatprep.subr.mxu0 0.0
        %684 = vmatpush1.xpose.msra.mxu0 0.0
        %685 = vmatprep.subr.mxu0 0.0
        %686 = vmatpush1.xpose.msra.mxu0 0.0
        %687 = vmatprep.subr.mxu0 0.0
        %688 = vmatpush1.xpose.msra.mxu0 0.0
        %689 = vmatprep.subr.mxu0 0.0
        %690 = vmatpush1.xpose.msra.mxu0 0.0
        %691 = vmatprep.subr.mxu0 0.0
        %692 = vmatpush1.xpose.msra.mxu0 0.0
        %693 = vmatprep.subr.mxu0 0.0
        %694 = vmatpush1.xpose.msra.mxu0 0.0
        %695 = vmatprep.subr.mxu0 0.0
        %696 = vmatpush1.xpose.msra.mxu0 0.0
        %697 = vmatprep.subr.mxu0 0.0
        %698 = vmatpush1.xpose.msra.mxu0 0.0
        %699 = vmatprep.subr.mxu0 0.0
        %700 = vmatpush1.xpose.msra.mxu0 0.0
        %701 = vmatprep.subr.mxu0 0.0
        %702 = vmatpush1.xpose.msra.mxu0 0.0
        %703 = vmatprep.subr.mxu0 0.0
        %704 = vmatpush1.xpose.msra.mxu0 0.0
        %705 = vmatprep.subr.mxu0 0.0
        %706 = vmatpush1.xpose.msra.mxu0 0.0
        %707 = vmatprep.subr.mxu0 0.0
        %708 = vmatpush1.xpose.msra.mxu0 0.0
        %709 = vmatprep.subr.mxu0 0.0
        %710 = vmatpush1.xpose.msra.mxu0 0.0
        %711 = vmatprep.subr.mxu0 0.0
        %712 = vmatpush1.xpose.msra.mxu0 0.0
        %713 = vmatprep.subr.mxu0 0.0
        %714 = vmatpush1.xpose.msra.mxu0 0.0
        %715 = vmatprep.subr.mxu0 0.0
        %716 = vmatpush1.xpose.msra.mxu0 0.0
        %717 = vmatprep.subr.mxu0 0.0
        %718 = vmatpush1.xpose.msra.mxu0 0.0
        %719 = vmatprep.mubr.f32.mxu0 0.0
        %720 = vmatmul.mubr.f32.gmra.mrb[0].mxu0 %v651
        %v721 = vpop.f32.mrb[0].mxu0
        %v722 = vadd.f32 0.0, %v721
        %v723 = vpop.f32.mrb[0].mxu0
        %724 = vdwg.mxu0
        %v725 = vsel %vm380, %v722, -inf
        %v726 = vsel %vm305, %v725, -inf
        %727 = vmax.xlane.f32.xlu0 %v726
        %v728 = vpop.xlane.xlu0 %727
        %v729 = vsub.f32 -inf, %v728
        %v730 = vmul.f32 %v729, 1.442695
        %v731 = vpow.pop %v730
        %v732 = vsub.f32 %v725, %v728
        %v733 = vmul.f32 %v732, 1.442695
        %v734 = vpow.pop %v733
        %v735 = vmul.f32 %v731, 0.0
        %v736 = vsel %vm305, %v734, 0.0
        %737 = vadd.xlane.f32.xlu0 %v736
        %v738 = vpop.xlane.xlu0 %737
        %v739 = vadd.f32 %v735, %v738
        %740 = vrot.lane.b32.xlu0 %v301, 48
        %v741 = vpop.permute.xlu0 %740
        %v744 = vsel %vm305, %v734, 0
        %746 = vmatprep.subr.mxu0 0.0
        %747 = vmatpush1.msra.mxu0 %v741
        %748 = vmatprep.subr.mxu0 0.0
        %749 = vmatpush1.msra.mxu0 0.0
        %750 = vmatprep.subr.mxu0 0.0
        %751 = vmatpush1.msra.mxu0 0.0
        %752 = vmatprep.subr.mxu0 0.0
        %753 = vmatpush1.msra.mxu0 0.0
        %754 = vmatprep.subr.mxu0 0.0
        %755 = vmatpush1.msra.mxu0 0.0
        %756 = vmatprep.subr.mxu0 0.0
        %757 = vmatpush1.msra.mxu0 0.0
        %758 = vmatprep.subr.mxu0 0.0
        %759 = vmatpush1.msra.mxu0 0.0
        %760 = vmatprep.subr.mxu0 0.0
        %761 = vmatpush1.msra.mxu0 0.0
        %762 = vmatprep.subr.mxu0 0.0
        %763 = vmatpush1.msra.mxu0 0.0
        %764 = vmatprep.subr.mxu0 0.0
        %765 = vmatpush1.msra.mxu0 0.0
        %766 = vmatprep.subr.mxu0 0.0
        %767 = vmatpush1.msra.mxu0 0.0
        %768 = vmatprep.subr.mxu0 0.0
        %769 = vmatpush1.msra.mxu0 0.0
        %770 = vmatprep.subr.mxu0 0.0
        %771 = vmatpush1.msra.mxu0 0.0
        %772 = vmatprep.subr.mxu0 0.0
        %773 = vmatpush1.msra.mxu0 0.0
        %774 = vmatprep.subr.mxu0 0.0
        %775 = vmatpush1.msra.mxu0 0.0
        %776 = vmatprep.subr.mxu0 0.0
        %777 = vmatpush1.msra.mxu0 0.0
        %778 = vmatprep.subr.mxu0 0.0
        %779 = vmatpush1.msra.mxu0 0.0
        %780 = vmatprep.subr.mxu0 0.0
        %781 = vmatpush1.msra.mxu0 0.0
        %782 = vmatprep.subr.mxu0 0.0
        %783 = vmatpush1.msra.mxu0 0.0
        %784 = vmatprep.subr.mxu0 0.0
        %785 = vmatpush1.msra.mxu0 0.0
        %786 = vmatprep.subr.mxu0 0.0
        %787 = vmatpush1.msra.mxu0 0.0
        %788 = vmatprep.subr.mxu0 0.0
        %789 = vmatpush1.msra.mxu0 0.0
        %790 = vmatprep.subr.mxu0 0.0
        %791 = vmatpush1.msra.mxu0 0.0
        %792 = vmatprep.subr.mxu0 0.0
        %793 = vmatpush1.msra.mxu0 0.0
        %794 = vmatprep.subr.mxu0 0.0
        %795 = vmatpush1.msra.mxu0 0.0
        %796 = vmatprep.subr.mxu0 0.0
        %797 = vmatpush1.msra.mxu0 0.0
        %798 = vmatprep.subr.mxu0 0.0
        %799 = vmatpush1.msra.mxu0 0.0
        %800 = vmatprep.subr.mxu0 0.0
        %801 = vmatpush1.msra.mxu0 0.0
        %802 = vmatprep.subr.mxu0 0.0
        %803 = vmatpush1.msra.mxu0 0.0
        %804 = vmatprep.subr.mxu0 0.0
        %805 = vmatpush1.msra.mxu0 0.0
        %806 = vmatprep.subr.mxu0 0.0
        %807 = vmatpush1.msra.mxu0 0.0
        %808 = vmatprep.subr.mxu0 0.0
        %809 = vmatpush1.msra.mxu0 0.0
        %810 = vmatprep.mubr.f32.mxu0 0.0
        %811 = vmatmul.mubr.f32.gmra.mrb[0].mxu0 %v744
        %v812 = vpop.f32.mrb[0].mxu0
        %v813 = vadd.f32 0.0, %v812
        %v814 = vpop.f32.mrb[0].mxu0
        %815 = vdwg.mxu0
        %v816 = vadd.f32 %v735, %v813
        %v817 = vrcp.pop %v739
        %v818 = vmul.f32 %v816, %v817
        %819 = vrot.lane.b32.xlu0 %v301, 104
        %v820 = vpop.permute.xlu0 %819
        %821 = vrot.lane.b32.xlu0 %v301, 72
        %v822 = vpop.permute.xlu0 %821
        %v823 = vsel %vm305, %v820, 0
        %v825 = vsel %vm305, %v822, 0
        %827 = vmatprep.subr.mxu0 0.0
        %828 = vmatpush1.xpose.msra.mxu0 %v825
        %829 = vmatprep.subr.mxu0 0.0
        %830 = vmatpush1.xpose.msra.mxu0 0.0
        %831 = vmatprep.subr.mxu0 0.0
        %832 = vmatpush1.xpose.msra.mxu0 0.0
        %833 = vmatprep.subr.mxu0 0.0
        %834 = vmatpush1.xpose.msra.mxu0 0.0
        %835 = vmatprep.subr.mxu0 0.0
        %836 = vmatpush1.xpose.msra.mxu0 0.0
        %837 = vmatprep.subr.mxu0 0.0
        %838 = vmatpush1.xpose.msra.mxu0 0.0
        %839 = vmatprep.subr.mxu0 0.0
        %840 = vmatpush1.xpose.msra.mxu0 0.0
        %841 = vmatprep.subr.mxu0 0.0
        %842 = vmatpush1.xpose.msra.mxu0 0.0
        %843 = vmatprep.subr.mxu0 0.0
        %844 = vmatpush1.xpose.msra.mxu0 0.0
        %845 = vmatprep.subr.mxu0 0.0
        %846 = vmatpush1.xpose.msra.mxu0 0.0
        %847 = vmatprep.subr.mxu0 0.0
        %848 = vmatpush1.xpose.msra.mxu0 0.0
        %849 = vmatprep.subr.mxu0 0.0
        %850 = vmatpush1.xpose.msra.mxu0 0.0
        %851 = vmatprep.subr.mxu0 0.0
        %852 = vmatpush1.xpose.msra.mxu0 0.0
        %853 = vmatprep.subr.mxu0 0.0
        %854 = vmatpush1.xpose.msra.mxu0 0.0
        %855 = vmatprep.subr.mxu0 0.0
        %856 = vmatpush1.xpose.msra.mxu0 0.0
        %857 = vmatprep.subr.mxu0 0.0
        %858 = vmatpush1.xpose.msra.mxu0 0.0
        %859 = vmatprep.subr.mxu0 0.0
        %860 = vmatpush1.xpose.msra.mxu0 0.0
        %861 = vmatprep.subr.mxu0 0.0
        %862 = vmatpush1.xpose.msra.mxu0 0.0
        %863 = vmatprep.subr.mxu0 0.0
        %864 = vmatpush1.xpose.msra.mxu0 0.0
        %865 = vmatprep.subr.mxu0 0.0
        %866 = vmatpush1.xpose.msra.mxu0 0.0
        %867 = vmatprep.subr.mxu0 0.0
        %868 = vmatpush1.xpose.msra.mxu0 0.0
        %869 = vmatprep.subr.mxu0 0.0
        %870 = vmatpush1.xpose.msra.mxu0 0.0
        %871 = vmatprep.subr.mxu0 0.0
        %872 = vmatpush1.xpose.msra.mxu0 0.0
        %873 = vmatprep.subr.mxu0 0.0
        %874 = vmatpush1.xpose.msra.mxu0 0.0
        %875 = vmatprep.subr.mxu0 0.0
        %876 = vmatpush1.xpose.msra.mxu0 0.0
        %877 = vmatprep.subr.mxu0 0.0
        %878 = vmatpush1.xpose.msra.mxu0 0.0
        %879 = vmatprep.subr.mxu0 0.0
        %880 = vmatpush1.xpose.msra.mxu0 0.0
        %881 = vmatprep.subr.mxu0 0.0
        %882 = vmatpush1.xpose.msra.mxu0 0.0
        %883 = vmatprep.subr.mxu0 0.0
        %884 = vmatpush1.xpose.msra.mxu0 0.0
        %885 = vmatprep.subr.mxu0 0.0
        %886 = vmatpush1.xpose.msra.mxu0 0.0
        %887 = vmatprep.subr.mxu0 0.0
        %888 = vmatpush1.xpose.msra.mxu0 0.0
        %889 = vmatprep.subr.mxu0 0.0
        %890 = vmatpush1.xpose.msra.mxu0 0.0
        %891 = vmatprep.mubr.f32.mxu0 0.0
        %892 = vmatmul.mubr.f32.gmra.mrb[0].mxu0 %v823
        %v893 = vpop.f32.mrb[0].mxu0
        %v894 = vadd.f32 0.0, %v893
        %v895 = vpop.f32.mrb[0].mxu0
        %896 = vdwg.mxu0
        %v897 = vsel %vm380, %v894, -inf
        %v898 = vsel %vm305, %v897, -inf
        %899 = vmax.xlane.f32.xlu0 %v898
        %v900 = vpop.xlane.xlu0 %899
        %v901 = vsub.f32 -inf, %v900
        %v902 = vmul.f32 %v901, 1.442695
        %v903 = vpow.pop %v902
        %v904 = vsub.f32 %v897, %v900
        %v905 = vmul.f32 %v904, 1.442695
        %v906 = vpow.pop %v905
        %v907 = vmul.f32 %v903, 0.0
        %v908 = vsel %vm305, %v906, 0.0
        %909 = vadd.xlane.f32.xlu0 %v908
        %v910 = vpop.xlane.xlu0 %909
        %v911 = vadd.f32 %v907, %v910
        %912 = vrot.lane.b32.xlu0 %v301, 40
        %v913 = vpop.permute.xlu0 %912
        %v916 = vsel %vm305, %v906, 0
        %918 = vmatprep.subr.mxu0 0.0
        %919 = vmatpush1.msra.mxu0 %v913
        %920 = vmatprep.subr.mxu0 0.0
        %921 = vmatpush1.msra.mxu0 0.0
        %922 = vmatprep.subr.mxu0 0.0
        %923 = vmatpush1.msra.mxu0 0.0
        %924 = vmatprep.subr.mxu0 0.0
        %925 = vmatpush1.msra.mxu0 0.0
        %926 = vmatprep.subr.mxu0 0.0
        %927 = vmatpush1.msra.mxu0 0.0
        %928 = vmatprep.subr.mxu0 0.0
        %929 = vmatpush1.msra.mxu0 0.0
        %930 = vmatprep.subr.mxu0 0.0
        %931 = vmatpush1.msra.mxu0 0.0
        %932 = vmatprep.subr.mxu0 0.0
        %933 = vmatpush1.msra.mxu0 0.0
        %934 = vmatprep.subr.mxu0 0.0
        %935 = vmatpush1.msra.mxu0 0.0
        %936 = vmatprep.subr.mxu0 0.0
        %937 = vmatpush1.msra.mxu0 0.0
        %938 = vmatprep.subr.mxu0 0.0
        %939 = vmatpush1.msra.mxu0 0.0
        %940 = vmatprep.subr.mxu0 0.0
        %941 = vmatpush1.msra.mxu0 0.0
        %942 = vmatprep.subr.mxu0 0.0
        %943 = vmatpush1.msra.mxu0 0.0
        %944 = vmatprep.subr.mxu0 0.0
        %945 = vmatpush1.msra.mxu0 0.0
        %946 = vmatprep.subr.mxu0 0.0
        %947 = vmatpush1.msra.mxu0 0.0
        %948 = vmatprep.subr.mxu0 0.0
        %949 = vmatpush1.msra.mxu0 0.0
        %950 = vmatprep.subr.mxu0 0.0
        %951 = vmatpush1.msra.mxu0 0.0
        %952 = vmatprep.subr.mxu0 0.0
        %953 = vmatpush1.msra.mxu0 0.0
        %954 = vmatprep.subr.mxu0 0.0
        %955 = vmatpush1.msra.mxu0 0.0
        %956 = vmatprep.subr.mxu0 0.0
        %957 = vmatpush1.msra.mxu0 0.0
        %958 = vmatprep.subr.mxu0 0.0
        %959 = vmatpush1.msra.mxu0 0.0
        %960 = vmatprep.subr.mxu0 0.0
        %961 = vmatpush1.msra.mxu0 0.0
        %962 = vmatprep.subr.mxu0 0.0
        %963 = vmatpush1.msra.mxu0 0.0
        %964 = vmatprep.subr.mxu0 0.0
        %965 = vmatpush1.msra.mxu0 0.0
        %966 = vmatprep.subr.mxu0 0.0
        %967 = vmatpush1.msra.mxu0 0.0
        %968 = vmatprep.subr.mxu0 0.0
        %969 = vmatpush1.msra.mxu0 0.0
        %970 = vmatprep.subr.mxu0 0.0
        %971 = vmatpush1.msra.mxu0 0.0
        %972 = vmatprep.subr.mxu0 0.0
        %973 = vmatpush1.msra.mxu0 0.0
        %974 = vmatprep.subr.mxu0 0.0
        %975 = vmatpush1.msra.mxu0 0.0
        %976 = vmatprep.subr.mxu0 0.0
        %977 = vmatpush1.msra.mxu0 0.0
        %978 = vmatprep.subr.mxu0 0.0
        %979 = vmatpush1.msra.mxu0 0.0
        %980 = vmatprep.subr.mxu0 0.0
        %981 = vmatpush1.msra.mxu0 0.0
        %982 = vmatprep.mubr.f32.mxu0 0.0
        %983 = vmatmul.mubr.f32.gmra.mrb[0].mxu0 %v916
        %v984 = vpop.f32.mrb[0].mxu0
        %v985 = vadd.f32 0.0, %v984
        %v986 = vpop.f32.mrb[0].mxu0
        %987 = vdwg.mxu0
        %v988 = vadd.f32 %v907, %v985
        %v989 = vrcp.pop %v911
        %v990 = vmul.f32 %v988, %v989
        %992 = vrot.lane.b32.xlu0 %v646, 8
        %v993 = vpop.permute.xlu0 %992
        %996 = vrot.lane.b32.xlu0 %v818, 16
        %v997 = vpop.permute.xlu0 %996
        %1000 = vrot.lane.b32.xlu0 %v990, 24
        %v1001 = vpop.permute.xlu0 %1000
        %v1003 = vsel %vm305, %v474, %v993
        %vm1004 = vcmask 130048
        %v1005 = vsel %vm1004, %v1003, %v997
        %vm1006 = vcmask 195584
        %v1007 = vsel %vm1006, %v1005, %v1001
        %1008 = vst.msk [vmem:[#allocation3] sm:$0xff] %vm220, %v1007
        %v1009 = vld [vmem:[#allocation3] sm:$0xff]
        %v1010 = vld [vmem:[#allocation9] sm:$0xff]
        %v1011 = vld [vmem:[#allocation9 + $0x8] sm:$0xff]
        %v1012 = vld [vmem:[#allocation9 + $0x10] sm:$0xff]
        %v1013 = vld [vmem:[#allocation9 + $0x18] sm:$0xff]
        %v1015 = vsel %vm220, %v1009, 0
        %1017 = vmatprep.subr.mxu0 0.0
        %1018 = vmatpush1.msra.mxu0 %v1010
        %1019 = vmatprep.subr.mxu0 0.0
        %1020 = vmatpush1.msra.mxu0 %v1011
        %1021 = vmatprep.subr.mxu0 0.0
        %1022 = vmatpush1.msra.mxu0 %v1012
        %1023 = vmatprep.subr.mxu0 0.0
        %1024 = vmatpush1.msra.mxu0 %v1013
        %1025 = vmatprep.subr.mxu0 0.0
        %1026 = vmatpush1.msra.mxu0 0.0
        %1027 = vmatprep.subr.mxu0 0.0
        %1028 = vmatpush1.msra.mxu0 0.0
        %1029 = vmatprep.subr.mxu0 0.0
        %1030 = vmatpush1.msra.mxu0 0.0
        %1031 = vmatprep.subr.mxu0 0.0
        %1032 = vmatpush1.msra.mxu0 0.0
        %1033 = vmatprep.subr.mxu0 0.0
        %1034 = vmatpush1.msra.mxu0 0.0
        %1035 = vmatprep.subr.mxu0 0.0
        %1036 = vmatpush1.msra.mxu0 0.0
        %1037 = vmatprep.subr.mxu0 0.0
        %1038 = vmatpush1.msra.mxu0 0.0
        %1039 = vmatprep.subr.mxu0 0.0
        %1040 = vmatpush1.msra.mxu0 0.0
        %1041 = vmatprep.subr.mxu0 0.0
        %1042 = vmatpush1.msra.mxu0 0.0
        %1043 = vmatprep.subr.mxu0 0.0
        %1044 = vmatpush1.msra.mxu0 0.0
        %1045 = vmatprep.subr.mxu0 0.0
        %1046 = vmatpush1.msra.mxu0 0.0
        %1047 = vmatprep.subr.mxu0 0.0
        %1048 = vmatpush1.msra.mxu0 0.0
        %1049 = vmatprep.subr.mxu0 0.0
        %1050 = vmatpush1.msra.mxu0 0.0
        %1051 = vmatprep.subr.mxu0 0.0
        %1052 = vmatpush1.msra.mxu0 0.0
        %1053 = vmatprep.subr.mxu0 0.0
        %1054 = vmatpush1.msra.mxu0 0.0
        %1055 = vmatprep.subr.mxu0 0.0
        %1056 = vmatpush1.msra.mxu0 0.0
        %1057 = vmatprep.subr.mxu0 0.0
        %1058 = vmatpush1.msra.mxu0 0.0
        %1059 = vmatprep.subr.mxu0 0.0
        %1060 = vmatpush1.msra.mxu0 0.0
        %1061 = vmatprep.subr.mxu0 0.0
        %1062 = vmatpush1.msra.mxu0 0.0
        %1063 = vmatprep.subr.mxu0 0.0
        %1064 = vmatpush1.msra.mxu0 0.0
        %1065 = vmatprep.subr.mxu0 0.0
        %1066 = vmatpush1.msra.mxu0 0.0
        %1067 = vmatprep.subr.mxu0 0.0
        %1068 = vmatpush1.msra.mxu0 0.0
        %1069 = vmatprep.subr.mxu0 0.0
        %1070 = vmatpush1.msra.mxu0 0.0
        %1071 = vmatprep.subr.mxu0 0.0
        %1072 = vmatpush1.msra.mxu0 0.0
        %1073 = vmatprep.subr.mxu0 0.0
        %1074 = vmatpush1.msra.mxu0 0.0
        %1075 = vmatprep.subr.mxu0 0.0
        %1076 = vmatpush1.msra.mxu0 0.0
        %1077 = vmatprep.subr.mxu0 0.0
        %1078 = vmatpush1.msra.mxu0 0.0
        %1079 = vmatprep.subr.mxu0 0.0
        %1080 = vmatpush1.msra.mxu0 0.0
        %1081 = vmatprep.mubr.f32.mxu0 0.0
        %1082 = vmatmul.mubr.f32.gmra.mrb[0].mxu0 %v1015
        %v1083 = vpop.f32.mrb[0].mxu0
        %v1084 = vadd.f32 0.0, %v1083
        %v1085 = vpop.f32.mrb[0].mxu0
        %1086 = vdwg.mxu0
        %1087 = vst.msk [vmem:[%s214] sm:$0xff] %vm220, %v1084
        %s1088 = sand.u32 %s97, 1
        %s1089 = scalar_lea.sflag [#allocation6], %s1088
        %s1090 = sand.u32 %s97, 1
        %s1091 = smul.addr %s1090, 8
        %s1092 = scalar_lea.vmem [#allocation10], %s1091
        // Predicated region
        $region45: #{tpu_custom_call.1} parent=31 // pred_check
          %p1093 = pneg %p107
        $region46: #{tpu_custom_call.1} parent=31 // pred_check_branch
          %1095 = sbr.rel (%p1093) target = $region48
        $region47: #{tpu_custom_call.1} parent=31 // pred_region
          %s1097 = ssub.s32 128, 128
          %1098 = vsyncadd %s1089, %s1097
          %s1099 = smul.addr %s21, 128
          %s1100 = scalar_lea.hbm %s3, %s1099
          %s1102 = sshll.u32 %s1092, 4
          %s1103 = int_to_ptr.vmem [resolvable:$true] %s1102
          %1105 = dma.vmem_to_hbm [thread:$0]  %s1103, 128, %s1100, %s1089
        $region48: #{tpu_custom_call.1} parent=31 // pred_fallthru
          _
      $region32: #{tpu_custom_call.1} parent=5 // pred_fallthru
        _
      %p1106 = scmp.le.s32.totalorder 2, %s16
      // Predicated region
      $region49: #{tpu_custom_call.1} parent=5 // pred_check
        %p1107 = pneg %p1106
      $region50: #{tpu_custom_call.1} parent=5 // pred_check_branch
        %1109 = sbr.rel (%p1107) target = $region52
      $region51: #{tpu_custom_call.1} parent=5 // pred_region
        %s1110 = ssub.s32 %s16, 2
        // Predicated region
        $region53: #{tpu_custom_call.1} parent=51 // pred_check
          %p1111 = pneg %p113
        $region54: #{tpu_custom_call.1} parent=51 // pred_check_branch
          %1113 = sbr.rel (%p1111) target = $region56
        $region55: #{tpu_custom_call.1} parent=51 // pred_region
          %s1114 = sand.u32 %s98, 1
          %s1115 = scalar_lea.sflag [#allocation6], %s1114
          %s1116 = sand.u32 %s98, 1
          %s1117 = smul.addr %s1116, 8
          %s1118 = scalar_lea.vmem [#allocation10], %s1117
          %1119 = dma.done %s1115, 128
        $region56: #{tpu_custom_call.1} parent=51 // pred_fallthru
          _
      $region52: #{tpu_custom_call.1} parent=5 // pred_fallthru
        _
    $region6: #{tpu_custom_call.1} parent=1 // loop_footer
      %s20 = sadd.s32 1, %s16
    $region7: #{tpu_custom_call.1} parent=1 // loop_footer_branch
      %15 = sbr.rel target = $region3
    $region8: #{tpu_custom_call.1} parent=1 // loop_exit
      _
    %1120 = vsyncpa [#allocation5], 1
    %s1121 = scalar_lea.sflag [#allocation5], 1
    %1122 = vsyncpa %s1121, 1
    %1123 = vsyncpa [#allocation8], 1
    %1124 = vsyncpa [#allocation6], 1
    %s1125 = scalar_lea.sflag [#allocation6], 1
    %1126 = vsyncpa %s1125, 1

// kernel: tpu_custom_call.1
$region0: #{tpu_custom_call.1}
  #allocation0 [shape = 'u32[]', space=smem, size = 0x4, offset = 0x4, fixed_abs, tag = 'smem constant byte address 0x4 - core index']
  #allocation1 [shape = 'u32[144,128]{1,0:T(1,128)}', space=vmem, size = 0x12000, scoped, tag = 'internal scratch']
  #allocation2 [shape = 'f32[8,96]{1,0:T(8,128)}', space=vmem, size = 0x1000, scoped, tag = 'scratch operand']
  #allocation3 [shape = 'f32[8,32]{1,0:T(8,128)}', space=vmem, size = 0x1000, scoped, tag = 'scratch operand']
  %s0 = inlined_call_operand.hbm [shape: f32[2,8,32], index: 0, kind: input, shape index: {}]
  %s1 = inlined_call_operand.hbm [shape: f32[32,96], index: 1, kind: input, shape index: {}]
  %s2 = inlined_call_operand.hbm [shape: f32[32,32], index: 2, kind: input, shape index: {}]
  %s3 = inlined_call_operand.hbm [shape: f32[2,8,32], index: 3, kind: output, shape index: {}]
  %s4 = sld [smem:[#allocation0]]
  $region57: #{tpu_custom_call.1} parent=0
    _
  %s6 = ssub.s32 1, %s4
  %s7 = scalar_select 0, %s6, %s4
  $region1: #{tpu_custom_call.1} parent=0
    #allocation4 [shape = 'u8[8192]{0}', space=vmem, size = 0x2000, scoped, tag = 'input window, operand 0']
    #allocation5 [shape = 's32[2]{0}', space=sflag, size = 0x8, scoped, tag = 'scoped memory for tpu_custom_call.1']
    #allocation6 [shape = 's32[2]{0}', space=sflag, size = 0x8, scoped, tag = 'scoped memory for tpu_custom_call.1']
    #allocation7 [shape = 'u8[16384]{0}', space=vmem, size = 0x4000, scoped, tag = 'input window, operand 1, single buffered']
    #allocation8 [shape = 's32[1]{0}', space=sflag, size = 0x4, scoped, tag = 'scoped memory for tpu_custom_call.1']
    #allocation9 [shape = 'u8[16384]{0}', space=vmem, size = 0x4000, scoped, tag = 'input window, operand 2, single buffered']
    #allocation10 [shape = 'u8[8192]{0}', space=vmem, size = 0x2000, scoped, tag = 'output window, operand 0']
    %8 = vsyncpa [#allocation5], 0
    %s9 = scalar_lea.sflag [#allocation5], 1
    %10 = vsyncpa %s9, 0
    %11 = vsyncpa [#allocation8], 0
    %12 = vsyncpa [#allocation6], 0
    %s13 = scalar_lea.sflag [#allocation6], 1
    %14 = vsyncpa %s13, 0
    loop: start=0, step=1, limit=4
    $region2: #{tpu_custom_call.1} parent=1 // loop_pre_header
      _
    $region3: #{tpu_custom_call.1} parent=1 // loop_header
      %s16 = sphi 0, %s20
      %p17 = scmp.ge.s32.totalorder %s16, 4
      %s26 = sphi 0, %s28
      %s29 = sphi 0, %s26
      %s30 = sphi 0, %s29
      %s46 = sphi 0, %s30
      %s50 = sphi 0, %s50
      %s52 = sphi 0, %s50
      %s53 = sphi 0, %s52
      %s67 = sphi 0, %s53
      %s71 = sphi 0, %s71
      %s73 = sphi 0, %s71
      %s74 = sphi 0, %s73
      %s88 = sphi 0, %s74
      %s94 = sphi 0, %s96
      %s97 = sphi 0, %s94
      %s98 = sphi 0, %s97
      %s114 = sphi 0, %s98
    $region4: #{tpu_custom_call.1} parent=1 // loop_header_branch
      %19 = sbr.rel (%p17) target = $region8
    $region5: #{tpu_custom_call.1} parent=1 // loop_body
      %s21 = ssub.s32 %s16, 1
      %s22 = ssub.s32 %s16, 2
      %s23 = sadd.s32 %s16, 1
      %s24 = ssub.s32 %s16, %s23
      %p25 = scmp.eq.s32.totalorder %s24, 0
      %s27 = sadd.s32 %s26, 1
      %s28 = scalar_select %p25, %s26, %s27
      %p31 = pneg %p25
      %p32 = scmp.eq.s32.totalorder %s16, 1
      %p33 = por %p31, %p32
      %p34 = scmp.ne.s32.totalorder %s26, %s29
      %p35 = scmp.eq.s32.totalorder %s16, 0
      %p36 = por %p34, %p35
      %p37 = scmp.ne.s32.totalorder %s26, %s29
      %p38 = scmp.eq.s32.totalorder %s21, 1
      %p39 = por %p37, %p38
      %p40 = scmp.ne.s32.totalorder %s29, %s30
      %p41 = scmp.eq.s32.totalorder %s21, 0
      %p42 = por %p40, %p41
      %p43 = scmp.ne.s32.totalorder %s29, %s30
      %p44 = scmp.eq.s32.totalorder %s22, 1
      %p45 = por %p43, %p44
      %p47 = scmp.ne.s32.totalorder %s30, %s46
      %p48 = scmp.eq.s32.totalorder %s22, 0
      %p49 = por %p47, %p48
      %s51 = sadd.s32 %s50, 1
      %p54 = scmp.eq.s32.totalorder %s16, 1
      %p55 = scmp.ne.s32.totalorder %s50, %s52
      %p56 = scmp.eq.s32.totalorder %s16, 0
      %p57 = por %p55, %p56
      %p58 = scmp.ne.s32.totalorder %s50, %s52
      %p59 = scmp.eq.s32.totalorder %s21, 1
      %p60 = por %p58, %p59
      %p61 = scmp.ne.s32.totalorder %s52, %s53
      %p62 = scmp.eq.s32.totalorder %s21, 0
      %p63 = por %p61, %p62
      %p64 = scmp.ne.s32.totalorder %s52, %s53
      %p65 = scmp.eq.s32.totalorder %s22, 1
      %p66 = por %p64, %p65
      %p68 = scmp.ne.s32.totalorder %s53, %s67
      %p69 = scmp.eq.s32.totalorder %s22, 0
      %p70 = por %p68, %p69
      %s72 = sadd.s32 %s71, 1
      %p75 = scmp.eq.s32.totalorder %s16, 1
      %p76 = scmp.ne.s32.totalorder %s71, %s73
      %p77 = scmp.eq.s32.totalorder %s16, 0
      %p78 = por %p76, %p77
      %p79 = scmp.ne.s32.totalorder %s71, %s73
      %p80 = scmp.eq.s32.totalorder %s21, 1
      %p81 = por %p79, %p80
      %p82 = scmp.ne.s32.totalorder %s73, %s74
      %p83 = scmp.eq.s32.totalorder %s21, 0
      %p84 = por %p82, %p83
      %p85 = scmp.ne.s32.totalorder %s73, %s74
      %p86 = scmp.eq.s32.totalorder %s22, 1
      %p87 = por %p85, %p86
      %p89 = scmp.ne.s32.totalorder %s74, %s88
      %p90 = scmp.eq.s32.totalorder %s22, 0
      %p91 = por %p89, %p90
      %s92 = ssub.s32 %s16, %s23
      %p93 = scmp.eq.s32.totalorder %s92, 0
      %s95 = sadd.s32 %s94, 1
      %s96 = scalar_select %p93, %s94, %s95
      %p99 = pneg %p93
      %p100 = scmp.eq.s32.totalorder %s16, 1
      %p101 = por %p99, %p100
      %p102 = scmp.ne.s32.totalorder %s94, %s97
      %p103 = scmp.eq.s32.totalorder %s16, 0
      %p104 = por %p102, %p103
      %p105 = scmp.ne.s32.totalorder %s94, %s97
      %p106 = scmp.eq.s32.totalorder %s21, 1
      %p107 = por %p105, %p106
      %p108 = scmp.ne.s32.totalorder %s97, %s98
      %p109 = scmp.eq.s32.totalorder %s21, 0
      %p110 = por %p108, %p109
      %p111 = scmp.ne.s32.totalorder %s97, %s98
      %p112 = scmp.eq.s32.totalorder %s22, 1
      %p113 = por %p111, %p112
      %p115 = scmp.ne.s32.totalorder %s98, %s114
      %p116 = scmp.eq.s32.totalorder %s22, 0
      %p117 = por %p115, %p116
      %p118 = scmp.le.s32.totalorder 1, %s16
      %p119 = scmp.lt.s32.totalorder %s16, 3
      %p120 = pnand %p118, %p119
      %p121 = pneg %p120
      // Predicated region
      $region9: #{tpu_custom_call.1} parent=5 // pred_check
        _
      $region10: #{tpu_custom_call.1} parent=5 // pred_check_branch
        %123 = sbr.rel (%p120) target = $region12
      $region11: #{tpu_custom_call.1} parent=5 // pred_region
        %s124 = ssub.s32 %s16, 1
        // Predicated region
        $region13: #{tpu_custom_call.1} parent=11 // pred_check
          %p125 = pneg %p63
        $region14: #{tpu_custom_call.1} parent=11 // pred_check_branch
          %127 = sbr.rel (%p125) target = $region16
        $region15: #{tpu_custom_call.1} parent=11 // pred_region
          %s129 = ssub.s32 512, 512
          %130 = vsyncadd [#allocation8], %s129
          %s131 = sshll.u32 [#allocation7], 4
          %s132 = int_to_ptr.vmem [resolvable:$true] %s131
          %137 = dma.hbm_to_vmem [thread:$0]  %s1, 512, %s132, [#allocation8], 128, 128, 8
        $region16: #{tpu_custom_call.1} parent=11 // pred_fallthru
          _
        // Predicated region
        $region17: #{tpu_custom_call.1} parent=11 // pred_check
          %p138 = pneg %p84
        $region18: #{tpu_custom_call.1} parent=11 // pred_check_branch
          %140 = sbr.rel (%p138) target = $region20
        $region19: #{tpu_custom_call.1} parent=11 // pred_region
          %s142 = ssub.s32 512, 512
          %143 = vsyncadd [#allocation8], %s142
          %s144 = sshll.u32 [#allocation9], 4
          %s145 = int_to_ptr.vmem [resolvable:$true] %s144
          %150 = dma.hbm_to_vmem [thread:$0]  %s2, 512, %s145, [#allocation8], 128, 128, 8
        $region20: #{tpu_custom_call.1} parent=11 // pred_fallthru
          _
      $region12: #{tpu_custom_call.1} parent=5 // pred_fallthru
        _
      %p151 = scmp.lt.s32.totalorder %s16, 2
      // Predicated region
      $region21: #{tpu_custom_call.1} parent=5 // pred_check
        %p152 = pneg %p151
      $region22: #{tpu_custom_call.1} parent=5 // pred_check_branch
        %154 = sbr.rel (%p152) target = $region24
      $region23: #{tpu_custom_call.1} parent=5 // pred_region
        // Predicated region
        $region25: #{tpu_custom_call.1} parent=23 // pred_check
          %p155 = pneg %p36
        $region26: #{tpu_custom_call.1} parent=23 // pred_check_branch
          %157 = sbr.rel (%p155) target = $region28
        $region27: #{tpu_custom_call.1} parent=23 // pred_region
          %s158 = sand.u32 %s26, 1
          %s159 = scalar_lea.sflag [#allocation5], %s158
          %s160 = sand.u32 %s26, 1
          %s161 = smul.addr %s160, 8
          %s162 = scalar_lea.vmem [#allocation4], %s161
          %s164 = ssub.s32 128, 128
          %165 = vsyncadd %s159, %s164
          %s166 = smul.addr %s16, 128
          %s167 = scalar_lea.hbm %s0, %s166
          %s169 = sshll.u32 %s162, 4
          %s170 = int_to_ptr.vmem [resolvable:$true] %s169
          %172 = dma.hbm_to_vmem [thread:$0]  %s167, 128, %s170, %s159
        $region28: #{tpu_custom_call.1} parent=23 // pred_fallthru
          _
      $region24: #{tpu_custom_call.1} parent=5 // pred_fallthru
        _
      %p173 = scmp.le.s32.totalorder 1, %s16
      %p174 = scmp.lt.s32.totalorder %s16, 3
      %p175 = pnand %p173, %p174
      %p176 = pneg %p175
      // Predicated region
      $region29: #{tpu_custom_call.1} parent=5 // pred_check
        _
      $region30: #{tpu_custom_call.1} parent=5 // pred_check_branch
        %178 = sbr.rel (%p175) target = $region32
      $region31: #{tpu_custom_call.1} parent=5 // pred_region
        %s179 = ssub.s32 %s16, 1
        %s180 = sand.u32 %s29, 1
        %s181 = scalar_lea.sflag [#allocation5], %s180
        %s182 = sand.u32 %s29, 1
        %s183 = smul.addr %s182, 8
        %s184 = scalar_lea.vmem [#allocation4], %s183
        // Predicated region
        $region33: #{tpu_custom_call.1} parent=31 // pred_check
          %p185 = pneg %p42
        $region34: #{tpu_custom_call.1} parent=31 // pred_check_branch
          %187 = sbr.rel (%p185) target = $region36
        $region35: #{tpu_custom_call.1} parent=31 // pred_region
          %188 = dma.done %s181, 128
        $region36: #{tpu_custom_call.1} parent=31 // pred_fallthru
          _
        // Predicated region
        $region37: #{tpu_custom_call.1} parent=31 // pred_check
          %p189 = pneg %p63
        $region38: #{tpu_custom_call.1} parent=31 // pred_check_branch
          %191 = sbr.rel (%p189) target = $region40
        $region39: #{tpu_custom_call.1} parent=31 // pred_region
          %192 = dma.done [#allocation8], 512
        $region40: #{tpu_custom_call.1} parent=31 // pred_fallthru
          _
        // Predicated region
        $region41: #{tpu_custom_call.1} parent=31 // pred_check
          %p193 = pneg %p84
        $region42: #{tpu_custom_call.1} parent=31 // pred_check_branch
          %195 = sbr.rel (%p193) target = $region44
        $region43: #{tpu_custom_call.1} parent=31 // pred_region
          %196 = dma.done [#allocation8], 512
        $region44: #{tpu_custom_call.1} parent=31 // pred_fallthru
          _
        %s197 = sand.u32 %s29, 1
        %s198 = scalar_lea.sflag [#allocation5], %s197
        %s199 = sand.u32 %s29, 1
        %s200 = smul.addr %s199, 8
        %s201 = scalar_lea.vmem [#allocation4], %s200
        %p202 = pneg %p42
        %p203 = pneg %p39
        %p204 = pneg %p63
        %p205 = pneg %p60
        %p206 = pneg %p84
        %p207 = pneg %p81
        %p208 = pneg %p110
        %p209 = pneg %p107
        %s210 = sand.u32 %s97, 1
        %s211 = scalar_lea.sflag [#allocation6], %s210
        %s212 = sand.u32 %s97, 1
        %s213 = smul.addr %s212, 8
        %s214 = scalar_lea.vmem [#allocation10], %s213
        %v215 = vld [vmem:[%s184] sm:$0xff]
        %v216 = vld [vmem:[#allocation7] sm:$0xff]
        %v217 = vld [vmem:[#allocation7 + $0x8] sm:$0xff]
        %v218 = vld [vmem:[#allocation7 + $0x10] sm:$0xff]
        %v219 = vld [vmem:[#allocation7 + $0x18] sm:$0xff]
        %vm220 = vcmask 261120
        %v222 = vsel %vm220, %v215, 0
        %224 = vmatprep.subr.mxu0 0.0
        %225 = vmatpush1.msra.mxu0 %v216
        %226 = vmatprep.subr.mxu0 0.0
        %227 = vmatpush1.msra.mxu0 %v217
        %228 = vmatprep.subr.mxu0 0.0
        %229 = vmatpush1.msra.mxu0 %v218
        %230 = vmatprep.subr.mxu0 0.0
        %231 = vmatpush1.msra.mxu0 %v219
        %232 = vmatprep.subr.mxu0 0.0
        %233 = vmatpush1.msra.mxu0 0.0
        %234 = vmatprep.subr.mxu0 0.0
        %235 = vmatpush1.msra.mxu0 0.0
        %236 = vmatprep.subr.mxu0 0.0
        %237 = vmatpush1.msra.mxu0 0.0
        %238 = vmatprep.subr.mxu0 0.0
        %239 = vmatpush1.msra.mxu0 0.0
        %240 = vmatprep.subr.mxu0 0.0
        %241 = vmatpush1.msra.mxu0 0.0
        %242 = vmatprep.subr.mxu0 0.0
        %243 = vmatpush1.msra.mxu0 0.0
        %244 = vmatprep.subr.mxu0 0.0
        %245 = vmatpush1.msra.mxu0 0.0
        %246 = vmatprep.subr.mxu0 0.0
        %247 = vmatpush1.msra.mxu0 0.0
        %248 = vmatprep.subr.mxu0 0.0
        %249 = vmatpush1.msra.mxu0 0.0
        %250 = vmatprep.subr.mxu0 0.0
        %251 = vmatpush1.msra.mxu0 0.0
        %252 = vmatprep.subr.mxu0 0.0
        %253 = vmatpush1.msra.mxu0 0.0
        %254 = vmatprep.subr.mxu0 0.0
        %255 = vmatpush1.msra.mxu0 0.0
        %256 = vmatprep.subr.mxu0 0.0
        %257 = vmatpush1.msra.mxu0 0.0
        %258 = vmatprep.subr.mxu0 0.0
        %259 = vmatpush1.msra.mxu0 0.0
        %260 = vmatprep.subr.mxu0 0.0
        %261 = vmatpush1.msra.mxu0 0.0
        %262 = vmatprep.subr.mxu0 0.0
        %263 = vmatpush1.msra.mxu0 0.0
        %264 = vmatprep.subr.mxu0 0.0
        %265 = vmatpush1.msra.mxu0 0.0
        %266 = vmatprep.subr.mxu0 0.0
        %267 = vmatpush1.msra.mxu0 0.0
        %268 = vmatprep.subr.mxu0 0.0
        %269 = vmatpush1.msra.mxu0 0.0
        %270 = vmatprep.subr.mxu0 0.0
        %271 = vmatpush1.msra.mxu0 0.0
        %272 = vmatprep.subr.mxu0 0.0
        %273 = vmatpush1.msra.mxu0 0.0
        %274 = vmatprep.subr.mxu0 0.0
        %275 = vmatpush1.msra.mxu0 0.0
        %276 = vmatprep.subr.mxu0 0.0
        %277 = vmatpush1.msra.mxu0 0.0
        %278 = vmatprep.subr.mxu0 0.0
        %279 = vmatpush1.msra.mxu0 0.0
        %280 = vmatprep.subr.mxu0 0.0
        %281 = vmatpush1.msra.mxu0 0.0
        %282 = vmatprep.subr.mxu0 0.0
        %283 = vmatpush1.msra.mxu0 0.0
        %284 = vmatprep.subr.mxu0 0.0
        %285 = vmatpush1.msra.mxu0 0.0
        %286 = vmatprep.subr.mxu0 0.0
        %287 = vmatpush1.msra.mxu0 0.0
        %288 = vmatprep.mubr.f32.mxu0 0.0
        %289 = vmatmul.mubr.f32.gmra.mrb[0].mxu0 %v222
        %v290 = vpop.f32.mrb[0].mxu0
        %v291 = vadd.f32 0.0, %v290
        %v292 = vpop.f32.mrb[0].mxu0
        %293 = vdwg.mxu0
        %vm294 = vcmask 785408
        %295 = vst.msk [vmem:[#allocation2] sm:$0xff] %vm294, %v291
        %v296 = vlaneseq
        %v297 = vshrl.u32 %v296, 7
        %v298 = vlaneseq
        %v299 = vand.u32 %v298, 127
        %v300 = vsub.s32 %v299, %v297
        %v301 = vld [vmem:[#allocation2] sm:$0xff]
        %303 = vrot.lane.b32.xlu0 %v301, 96
        %v304 = vpop.permute.xlu0 %303
        %vm305 = vcmask 64512
        %v306 = vsel %vm305, %v301, 0
        %v308 = vsel %vm305, %v304, 0
        %310 = vmatprep.subr.mxu0 0.0
        %311 = vmatpush1.xpose.msra.mxu0 %v308
        %312 = vmatprep.subr.mxu0 0.0
        %313 = vmatpush1.xpose.msra.mxu0 0.0
        %314 = vmatprep.subr.mxu0 0.0
        %315 = vmatpush1.xpose.msra.mxu0 0.0
        %316 = vmatprep.subr.mxu0 0.0
        %317 = vmatpush1.xpose.msra.mxu0 0.0
        %318 = vmatprep.subr.mxu0 0.0
        %319 = vmatpush1.xpose.msra.mxu0 0.0
        %320 = vmatprep.subr.mxu0 0.0
        %321 = vmatpush1.xpose.msra.mxu0 0.0
        %322 = vmatprep.subr.mxu0 0.0
        %323 = vmatpush1.xpose.msra.mxu0 0.0
        %324 = vmatprep.subr.mxu0 0.0
        %325 = vmatpush1.xpose.msra.mxu0 0.0
        %326 = vmatprep.subr.mxu0 0.0
        %327 = vmatpush1.xpose.msra.mxu0 0.0
        %328 = vmatprep.subr.mxu0 0.0
        %329 = vmatpush1.xpose.msra.mxu0 0.0
        %330 = vmatprep.subr.mxu0 0.0
        %331 = vmatpush1.xpose.msra.mxu0 0.0
        %332 = vmatprep.subr.mxu0 0.0
        %333 = vmatpush1.xpose.msra.mxu0 0.0
        %334 = vmatprep.subr.mxu0 0.0
        %335 = vmatpush1.xpose.msra.mxu0 0.0
        %336 = vmatprep.subr.mxu0 0.0
        %337 = vmatpush1.xpose.msra.mxu0 0.0
        %338 = vmatprep.subr.mxu0 0.0
        %339 = vmatpush1.xpose.msra.mxu0 0.0
        %340 = vmatprep.subr.mxu0 0.0
        %341 = vmatpush1.xpose.msra.mxu0 0.0
        %342 = vmatprep.subr.mxu0 0.0
        %343 = vmatpush1.xpose.msra.mxu0 0.0
        %344 = vmatprep.subr.mxu0 0.0
        %345 = vmatpush1.xpose.msra.mxu0 0.0
        %346 = vmatprep.subr.mxu0 0.0
        %347 = vmatpush1.xpose.msra.mxu0 0.0
        %348 = vmatprep.subr.mxu0 0.0
        %349 = vmatpush1.xpose.msra.mxu0 0.0
        %350 = vmatprep.subr.mxu0 0.0
        %351 = vmatpush1.xpose.msra.mxu0 0.0
        %352 = vmatprep.subr.mxu0 0.0
        %353 = vmatpush1.xpose.msra.mxu0 0.0
        %354 = vmatprep.subr.mxu0 0.0
        %355 = vmatpush1.xpose.msra.mxu0 0.0
        %356 = vmatprep.subr.mxu0 0.0
        %357 = vmatpush1.xpose.msra.mxu0 0.0
        %358 = vmatprep.subr.mxu0 0.0
        %359 = vmatpush1.xpose.msra.mxu0 0.0
        %360 = vmatprep.subr.mxu0 0.0
        %361 = vmatpush1.xpose.msra.mxu0 0.0
        %362 = vmatprep.subr.mxu0 0.0
        %363 = vmatpush1.xpose.msra.mxu0 0.0
        %364 = vmatprep.subr.mxu0 0.0
        %365 = vmatpush1.xpose.msra.mxu0 0.0
        %366 = vmatprep.subr.mxu0 0.0
        %367 = vmatpush1.xpose.msra.mxu0 0.0
        %368 = vmatprep.subr.mxu0 0.0
        %369 = vmatpush1.xpose.msra.mxu0 0.0
        %370 = vmatprep.subr.mxu0 0.0
        %371 = vmatpush1.xpose.msra.mxu0 0.0
        %372 = vmatprep.subr.mxu0 0.0
        %373 = vmatpush1.xpose.msra.mxu0 0.0
        %374 = vmatprep.mubr.f32.mxu0 0.0
        %375 = vmatmul.mubr.f32.gmra.mrb[0].mxu0 %v306
        %v376 = vpop.f32.mrb[0].mxu0
        %v377 = vadd.f32 0.0, %v376
        %v378 = vpop.f32.mrb[0].mxu0
        %379 = vdwg.mxu0
        %vm380 = vcmp.le.s32.totalorder %v300, 0
        %v381 = vsel %vm380, %v377, -inf
        %v382 = vsel %vm305, %v381, -inf
        %383 = vmax.xlane.f32.xlu0 %v382
        %v384 = vpop.xlane.xlu0 %383
        %v385 = vsub.f32 -inf, %v384
        %v386 = vmul.f32 %v385, 1.442695
        %v387 = vpow.pop %v386
        %v388 = vsub.f32 %v381, %v384
        %v389 = vmul.f32 %v388, 1.442695
        %v390 = vpow.pop %v389
        %v391 = vmul.f32 %v387, 0.0
        %v392 = vsel %vm305, %v390, 0.0
        %393 = vadd.xlane.f32.xlu0 %v392
        %v394 = vpop.xlane.xlu0 %393
        %v395 = vadd.f32 %v391, %v394
        %396 = vrot.lane.b32.xlu0 %v301, 64
        %v397 = vpop.permute.xlu0 %396
        %v400 = vsel %vm305, %v390, 0
        %402 = vmatprep.subr.mxu0 0.0
        %403 = vmatpush1.msra.mxu0 %v397
        %404 = vmatprep.subr.mxu0 0.0
        %405 = vmatpush1.msra.mxu0 0.0
        %406 = vmatprep.subr.mxu0 0.0
        %407 = vmatpush1.msra.mxu0 0.0
        %408 = vmatprep.subr.mxu0 0.0
        %409 = vmatpush1.msra.mxu0 0.0
        %410 = vmatprep.subr.mxu0 0.0
        %411 = vmatpush1.msra.mxu0 0.0
        %412 = vmatprep.subr.mxu0 0.0
        %413 = vmatpush1.msra.mxu0 0.0
        %414 = vmatprep.subr.mxu0 0.0
        %415 = vmatpush1.msra.mxu0 0.0
        %416 = vmatprep.subr.mxu0 0.0
        %417 = vmatpush1.msra.mxu0 0.0
        %418 = vmatprep.subr.mxu0 0.0
        %419 = vmatpush1.msra.mxu0 0.0
        %420 = vmatprep.subr.mxu0 0.0
        %421 = vmatpush1.msra.mxu0 0.0
        %422 = vmatprep.subr.mxu0 0.0
        %423 = vmatpush1.msra.mxu0 0.0
        %424 = vmatprep.subr.mxu0 0.0
        %425 = vmatpush1.msra.mxu0 0.0
        %426 = vmatprep.subr.mxu0 0.0
        %427 = vmatpush1.msra.mxu0 0.0
        %428 = vmatprep.subr.mxu0 0.0
        %429 = vmatpush1.msra.mxu0 0.0
        %430 = vmatprep.subr.mxu0 0.0
        %431 = vmatpush1.msra.mxu0 0.0
        %432 = vmatprep.subr.mxu0 0.0
        %433 = vmatpush1.msra.mxu0 0.0
        %434 = vmatprep.subr.mxu0 0.0
        %435 = vmatpush1.msra.mxu0 0.0
        %436 = vmatprep.subr.mxu0 0.0
        %437 = vmatpush1.msra.mxu0 0.0
        %438 = vmatprep.subr.mxu0 0.0
        %439 = vmatpush1.msra.mxu0 0.0
        %440 = vmatprep.subr.mxu0 0.0
        %441 = vmatpush1.msra.mxu0 0.0
        %442 = vmatprep.subr.mxu0 0.0
        %443 = vmatpush1.msra.mxu0 0.0
        %444 = vmatprep.subr.mxu0 0.0
        %445 = vmatpush1.msra.mxu0 0.0
        %446 = vmatprep.subr.mxu0 0.0
        %447 = vmatpush1.msra.mxu0 0.0
        %448 = vmatprep.subr.mxu0 0.0
        %449 = vmatpush1.msra.mxu0 0.0
        %450 = vmatprep.subr.mxu0 0.0
        %451 = vmatpush1.msra.mxu0 0.0
        %452 = vmatprep.subr.mxu0 0.0
        %453 = vmatpush1.msra.mxu0 0.0
        %454 = vmatprep.subr.mxu0 0.0
        %455 = vmatpush1.msra.mxu0 0.0
        %456 = vmatprep.subr.mxu0 0.0
        %457 = vmatpush1.msra.mxu0 0.0
        %458 = vmatprep.subr.mxu0 0.0
        %459 = vmatpush1.msra.mxu0 0.0
        %460 = vmatprep.subr.mxu0 0.0
        %461 = vmatpush1.msra.mxu0 0.0
        %462 = vmatprep.subr.mxu0 0.0
        %463 = vmatpush1.msra.mxu0 0.0
        %464 = vmatprep.subr.mxu0 0.0
        %465 = vmatpush1.msra.mxu0 0.0
        %466 = vmatprep.mubr.f32.mxu0 0.0
        %467 = vmatmul.mubr.f32.gmra.mrb[0].mxu0 %v400
        %v468 = vpop.f32.mrb[0].mxu0
        %v469 = vadd.f32 0.0, %v468
        %v470 = vpop.f32.mrb[0].mxu0
        %471 = vdwg.mxu0
        %v472 = vadd.f32 %v391, %v469
        %v473 = vrcp.pop %v395
        %v474 = vmul.f32 %v472, %v473
        %475 = vrot.lane.b32.xlu0 %v301, 120
        %v476 = vpop.permute.xlu0 %475
        %477 = vrot.lane.b32.xlu0 %v301, 88
        %v478 = vpop.permute.xlu0 %477
        %v479 = vsel %vm305, %v476, 0
        %v481 = vsel %vm305, %v478, 0
        %483 = vmatprep.subr.mxu0 0.0
        %484 = vmatpush1.xpose.msra.mxu0 %v481
        %485 = vmatprep.subr.mxu0 0.0
        %486 = vmatpush1.xpose.msra.mxu0 0.0
        %487 = vmatprep.subr.mxu0 0.0
        %488 = vmatpush1.xpose.msra.mxu0 0.0
        %489 = vmatprep.subr.mxu0 0.0
        %490 = vmatpush1.xpose.msra.mxu0 0.0
        %491 = vmatprep.subr.mxu0 0.0
        %492 = vmatpush1.xpose.msra.mxu0 0.0
        %493 = vmatprep.subr.mxu0 0.0
        %494 = vmatpush1.xpose.msra.mxu0 0.0
        %495 = vmatprep.subr.mxu0 0.0
        %496 = vmatpush1.xpose.msra.mxu0 0.0
        %497 = vmatprep.subr.mxu0 0.0
        %498 = vmatpush1.xpose.msra.mxu0 0.0
        %499 = vmatprep.subr.mxu0 0.0
        %500 = vmatpush1.xpose.msra.mxu0 0.0
        %501 = vmatprep.subr.mxu0 0.0
        %502 = vmatpush1.xpose.msra.mxu0 0.0
        %503 = vmatprep.subr.mxu0 0.0
        %504 = vmatpush1.xpose.msra.mxu0 0.0
        %505 = vmatprep.subr.mxu0 0.0
        %506 = vmatpush1.xpose.msra.mxu0 0.0
        %507 = vmatprep.subr.mxu0 0.0
        %508 = vmatpush1.xpose.msra.mxu0 0.0
        %509 = vmatprep.subr.mxu0 0.0
        %510 = vmatpush1.xpose.msra.mxu0 0.0
        %511 = vmatprep.subr.mxu0 0.0
        %512 = vmatpush1.xpose.msra.mxu0 0.0
        %513 = vmatprep.subr.mxu0 0.0
        %514 = vmatpush1.xpose.msra.mxu0 0.0
        %515 = vmatprep.subr.mxu0 0.0
        %516 = vmatpush1.xpose.msra.mxu0 0.0
        %517 = vmatprep.subr.mxu0 0.0
        %518 = vmatpush1.xpose.msra.mxu0 0.0
        %519 = vmatprep.subr.mxu0 0.0
        %520 = vmatpush1.xpose.msra.mxu0 0.0
        %521 = vmatprep.subr.mxu0 0.0
        %522 = vmatpush1.xpose.msra.mxu0 0.0
        %523 = vmatprep.subr.mxu0 0.0
        %524 = vmatpush1.xpose.msra.mxu0 0.0
        %525 = vmatprep.subr.mxu0 0.0
        %526 = vmatpush1.xpose.msra.mxu0 0.0
        %527 = vmatprep.subr.mxu0 0.0
        %528 = vmatpush1.xpose.msra.mxu0 0.0
        %529 = vmatprep.subr.mxu0 0.0
        %530 = vmatpush1.xpose.msra.mxu0 0.0
        %531 = vmatprep.subr.mxu0 0.0
        %532 = vmatpush1.xpose.msra.mxu0 0.0
        %533 = vmatprep.subr.mxu0 0.0
        %534 = vmatpush1.xpose.msra.mxu0 0.0
        %535 = vmatprep.subr.mxu0 0.0
        %536 = vmatpush1.xpose.msra.mxu0 0.0
        %537 = vmatprep.subr.mxu0 0.0
        %538 = vmatpush1.xpose.msra.mxu0 0.0
        %539 = vmatprep.subr.mxu0 0.0
        %540 = vmatpush1.xpose.msra.mxu0 0.0
        %541 = vmatprep.subr.mxu0 0.0
        %542 = vmatpush1.xpose.msra.mxu0 0.0
        %543 = vmatprep.subr.mxu0 0.0
        %544 = vmatpush1.xpose.msra.mxu0 0.0
        %545 = vmatprep.subr.mxu0 0.0
        %546 = vmatpush1.xpose.msra.mxu0 0.0
        %547 = vmatprep.mubr.f32.mxu0 0.0
        %548 = vmatmul.mubr.f32.gmra.mrb[0].mxu0 %v479
        %v549 = vpop.f32.mrb[0].mxu0
        %v550 = vadd.f32 0.0, %v549
        %v551 = vpop.f32.mrb[0].mxu0
        %552 = vdwg.mxu0
        %v553 = vsel %vm380, %v550, -inf
        %v554 = vsel %vm305, %v553, -inf
        %555 = vmax.xlane.f32.xlu0 %v554
        %v556 = vpop.xlane.xlu0 %555
        %v557 = vsub.f32 -inf, %v556
        %v558 = vmul.f32 %v557, 1.442695
        %v559 = vpow.pop %v558
        %v560 = vsub.f32 %v553, %v556
        %v561 = vmul.f32 %v560, 1.442695
        %v562 = vpow.pop %v561
        %v563 = vmul.f32 %v559, 0.0
        %v564 = vsel %vm305, %v562, 0.0
        %565 = vadd.xlane.f32.xlu0 %v564
        %v566 = vpop.xlane.xlu0 %565
        %v567 = vadd.f32 %v563, %v566
        %568 = vrot.lane.b32.xlu0 %v301, 56
        %v569 = vpop.permute.xlu0 %568
        %v572 = vsel %vm305, %v562, 0
        %574 = vmatprep.subr.mxu0 0.0
        %575 = vmatpush1.msra.mxu0 %v569
        %576 = vmatprep.subr.mxu0 0.0
        %577 = vmatpush1.msra.mxu0 0.0
        %578 = vmatprep.subr.mxu0 0.0
        %579 = vmatpush1.msra.mxu0 0.0
        %580 = vmatprep.subr.mxu0 0.0
        %581 = vmatpush1.msra.mxu0 0.0
        %582 = vmatprep.subr.mxu0 0.0
        %583 = vmatpush1.msra.mxu0 0.0
        %584 = vmatprep.subr.mxu0 0.0
        %585 = vmatpush1.msra.mxu0 0.0
        %586 = vmatprep.subr.mxu0 0.0
        %587 = vmatpush1.msra.mxu0 0.0
        %588 = vmatprep.subr.mxu0 0.0
        %589 = vmatpush1.msra.mxu0 0.0
        %590 = vmatprep.subr.mxu0 0.0
        %591 = vmatpush1.msra.mxu0 0.0
        %592 = vmatprep.subr.mxu0 0.0
        %593 = vmatpush1.msra.mxu0 0.0
        %594 = vmatprep.subr.mxu0 0.0
        %595 = vmatpush1.msra.mxu0 0.0
        %596 = vmatprep.subr.mxu0 0.0
        %597 = vmatpush1.msra.mxu0 0.0
        %598 = vmatprep.subr.mxu0 0.0
        %599 = vmatpush1.msra.mxu0 0.0
        %600 = vmatprep.subr.mxu0 0.0
        %601 = vmatpush1.msra.mxu0 0.0
        %602 = vmatprep.subr.mxu0 0.0
        %603 = vmatpush1.msra.mxu0 0.0
        %604 = vmatprep.subr.mxu0 0.0
        %605 = vmatpush1.msra.mxu0 0.0
        %606 = vmatprep.subr.mxu0 0.0
        %607 = vmatpush1.msra.mxu0 0.0
        %608 = vmatprep.subr.mxu0 0.0
        %609 = vmatpush1.msra.mxu0 0.0
        %610 = vmatprep.subr.mxu0 0.0
        %611 = vmatpush1.msra.mxu0 0.0
        %612 = vmatprep.subr.mxu0 0.0
        %613 = vmatpush1.msra.mxu0 0.0
        %614 = vmatprep.subr.mxu0 0.0
        %615 = vmatpush1.msra.mxu0 0.0
        %616 = vmatprep.subr.mxu0 0.0
        %617 = vmatpush1.msra.mxu0 0.0
        %618 = vmatprep.subr.mxu0 0.0
        %619 = vmatpush1.msra.mxu0 0.0
        %620 = vmatprep.subr.mxu0 0.0
        %621 = vmatpush1.msra.mxu0 0.0
        %622 = vmatprep.subr.mxu0 0.0
        %623 = vmatpush1.msra.mxu0 0.0
        %624 = vmatprep.subr.mxu0 0.0
        %625 = vmatpush1.msra.mxu0 0.0
        %626 = vmatprep.subr.mxu0 0.0
        %627 = vmatpush1.msra.mxu0 0.0
        %628 = vmatprep.subr.mxu0 0.0
        %629 = vmatpush1.msra.mxu0 0.0
        %630 = vmatprep.subr.mxu0 0.0
        %631 = vmatpush1.msra.mxu0 0.0
        %632 = vmatprep.subr.mxu0 0.0
        %633 = vmatpush1.msra.mxu0 0.0
        %634 = vmatprep.subr.mxu0 0.0
        %635 = vmatpush1.msra.mxu0 0.0
        %636 = vmatprep.subr.mxu0 0.0
        %637 = vmatpush1.msra.mxu0 0.0
        %638 = vmatprep.mubr.f32.mxu0 0.0
        %639 = vmatmul.mubr.f32.gmra.mrb[0].mxu0 %v572
        %v640 = vpop.f32.mrb[0].mxu0
        %v641 = vadd.f32 0.0, %v640
        %v642 = vpop.f32.mrb[0].mxu0
        %643 = vdwg.mxu0
        %v644 = vadd.f32 %v563, %v641
        %v645 = vrcp.pop %v567
        %v646 = vmul.f32 %v644, %v645
        %647 = vrot.lane.b32.xlu0 %v301, 112
        %v648 = vpop.permute.xlu0 %647
        %649 = vrot.lane.b32.xlu0 %v301, 80
        %v650 = vpop.permute.xlu0 %649
        %v651 = vsel %vm305, %v648, 0
        %v653 = vsel %vm305, %v650, 0
        %655 = vmatprep.subr.mxu0 0.0
        %656 = vmatpush1.xpose.msra.mxu0 %v653
        %657 = vmatprep.subr.mxu0 0.0
        %658 = vmatpush1.xpose.msra.mxu0 0.0
        %659 = vmatprep.subr.mxu0 0.0
        %660 = vmatpush1.xpose.msra.mxu0 0.0
        %661 = vmatprep.subr.mxu0 0.0
        %662 = vmatpush1.xpose.msra.mxu0 0.0
        %663 = vmatprep.subr.mxu0 0.0
        %664 = vmatpush1.xpose.msra.mxu0 0.0
        %665 = vmatprep.subr.mxu0 0.0
        %666 = vmatpush1.xpose.msra.mxu0 0.0
        %667 = vmatprep.subr.mxu0 0.0
        %668 = vmatpush1.xpose.msra.mxu0 0.0
        %669 = vmatprep.subr.mxu0 0.0
        %670 = vmatpush1.xpose.msra.mxu0 0.0
        %671 = vmatprep.subr.mxu0 0.0
        %672 = vmatpush1.xpose.msra.mxu0 0.0
        %673 = vmatprep.subr.mxu0 0.0
        %674 = vmatpush1.xpose.msra.mxu0 0.0
        %675 = vmatprep.subr.mxu0 0.0
        %676 = vmatpush1.xpose.msra.mxu0 0.0
        %677 = vmatprep.subr.mxu0 0.0
        %678 = vmatpush1.xpose.msra.mxu0 0.0
        %679 = vmatprep.subr.mxu0 0.0
        %680 = vmatpush1.xpose.msra.mxu0 0.0
        %681 = vmatprep.subr.mxu0 0.0
        %682 = vmatpush1.xpose.msra.mxu0 0.0
        %683 = vmatprep.subr.mxu0 0.0
        %684 = vmatpush1.xpose.msra.mxu0 0.0
        %685 = vmatprep.subr.mxu0 0.0
        %686 = vmatpush1.xpose.msra.mxu0 0.0
        %687 = vmatprep.subr.mxu0 0.0
        %688 = vmatpush1.xpose.msra.mxu0 0.0
        %689 = vmatprep.subr.mxu0 0.0
        %690 = vmatpush1.xpose.msra.mxu0 0.0
        %691 = vmatprep.subr.mxu0 0.0
        %692 = vmatpush1.xpose.msra.mxu0 0.0
        %693 = vmatprep.subr.mxu0 0.0
        %694 = vmatpush1.xpose.msra.mxu0 0.0
        %695 = vmatprep.subr.mxu0 0.0
        %696 = vmatpush1.xpose.msra.mxu0 0.0
        %697 = vmatprep.subr.mxu0 0.0
        %698 = vmatpush1.xpose.msra.mxu0 0.0
        %699 = vmatprep.subr.mxu0 0.0
        %700 = vmatpush1.xpose.msra.mxu0 0.0
        %701 = vmatprep.subr.mxu0 0.0
        %702 = vmatpush1.xpose.msra.mxu0 0.0
        %703 = vmatprep.subr.mxu0 0.0
        %704 = vmatpush1.xpose.msra.mxu0 0.0
        %705 = vmatprep.subr.mxu0 0.0
        %706 = vmatpush1.xpose.msra.mxu0 0.0
        %707 = vmatprep.subr.mxu0 0.0
        %708 = vmatpush1.xpose.msra.mxu0 0.0
        %709 = vmatprep.subr.mxu0 0.0
        %710 = vmatpush1.xpose.msra.mxu0 0.0
        %711 = vmatprep.subr.mxu0 0.0
        %712 = vmatpush1.xpose.msra.mxu0 0.0
        %713 = vmatprep.subr.mxu0 0.0
        %714 = vmatpush1.xpose.msra.mxu0 0.0
        %715 = vmatprep.subr.mxu0 0.0
        %716 = vmatpush1.xpose.msra.mxu0 0.0
        %717 = vmatprep.subr.mxu0 0.0
        %718 = vmatpush1.xpose.msra.mxu0 0.0
        %719 = vmatprep.mubr.f32.mxu0 0.0
        %720 = vmatmul.mubr.f32.gmra.mrb[0].mxu0 %v651
        %v721 = vpop.f32.mrb[0].mxu0
        %v722 = vadd.f32 0.0, %v721
        %v723 = vpop.f32.mrb[0].mxu0
        %724 = vdwg.mxu0
        %v725 = vsel %vm380, %v722, -inf
        %v726 = vsel %vm305, %v725, -inf
        %727 = vmax.xlane.f32.xlu0 %v726
        %v728 = vpop.xlane.xlu0 %727
        %v729 = vsub.f32 -inf, %v728
        %v730 = vmul.f32 %v729, 1.442695
        %v731 = vpow.pop %v730
        %v732 = vsub.f32 %v725, %v728
        %v733 = vmul.f32 %v732, 1.442695
        %v734 = vpow.pop %v733
        %v735 = vmul.f32 %v731, 0.0
        %v736 = vsel %vm305, %v734, 0.0
        %737 = vadd.xlane.f32.xlu0 %v736
        %v738 = vpop.xlane.xlu0 %737
        %v739 = vadd.f32 %v735, %v738
        %740 = vrot.lane.b32.xlu0 %v301, 48
        %v741 = vpop.permute.xlu0 %740
        %v744 = vsel %vm305, %v734, 0
        %746 = vmatprep.subr.mxu0 0.0
        %747 = vmatpush1.msra.mxu0 %v741
        %748 = vmatprep.subr.mxu0 0.0
        %749 = vmatpush1.msra.mxu0 0.0
        %750 = vmatprep.subr.mxu0 0.0
        %751 = vmatpush1.msra.mxu0 0.0
        %752 = vmatprep.subr.mxu0 0.0
        %753 = vmatpush1.msra.mxu0 0.0
        %754 = vmatprep.subr.mxu0 0.0
        %755 = vmatpush1.msra.mxu0 0.0
        %756 = vmatprep.subr.mxu0 0.0
        %757 = vmatpush1.msra.mxu0 0.0
        %758 = vmatprep.subr.mxu0 0.0
        %759 = vmatpush1.msra.mxu0 0.0
        %760 = vmatprep.subr.mxu0 0.0
        %761 = vmatpush1.msra.mxu0 0.0
        %762 = vmatprep.subr.mxu0 0.0
        %763 = vmatpush1.msra.mxu0 0.0
        %764 = vmatprep.subr.mxu0 0.0
        %765 = vmatpush1.msra.mxu0 0.0
        %766 = vmatprep.subr.mxu0 0.0
        %767 = vmatpush1.msra.mxu0 0.0
        %768 = vmatprep.subr.mxu0 0.0
        %769 = vmatpush1.msra.mxu0 0.0
        %770 = vmatprep.subr.mxu0 0.0
        %771 = vmatpush1.msra.mxu0 0.0
        %772 = vmatprep.subr.mxu0 0.0
        %773 = vmatpush1.msra.mxu0 0.0
        %774 = vmatprep.subr.mxu0 0.0
        %775 = vmatpush1.msra.mxu0 0.0
        %776 = vmatprep.subr.mxu0 0.0
        %777 = vmatpush1.msra.mxu0 0.0
        %778 = vmatprep.subr.mxu0 0.0
        %779 = vmatpush1.msra.mxu0 0.0
        %780 = vmatprep.subr.mxu0 0.0
        %781 = vmatpush1.msra.mxu0 0.0
        %782 = vmatprep.subr.mxu0 0.0
        %783 = vmatpush1.msra.mxu0 0.0
        %784 = vmatprep.subr.mxu0 0.0
        %785 = vmatpush1.msra.mxu0 0.0
        %786 = vmatprep.subr.mxu0 0.0
        %787 = vmatpush1.msra.mxu0 0.0
        %788 = vmatprep.subr.mxu0 0.0
        %789 = vmatpush1.msra.mxu0 0.0
        %790 = vmatprep.subr.mxu0 0.0
        %791 = vmatpush1.msra.mxu0 0.0
        %792 = vmatprep.subr.mxu0 0.0
        %793 = vmatpush1.msra.mxu0 0.0
        %794 = vmatprep.subr.mxu0 0.0
        %795 = vmatpush1.msra.mxu0 0.0
        %796 = vmatprep.subr.mxu0 0.0
        %797 = vmatpush1.msra.mxu0 0.0
        %798 = vmatprep.subr.mxu0 0.0
        %799 = vmatpush1.msra.mxu0 0.0
        %800 = vmatprep.subr.mxu0 0.0
        %801 = vmatpush1.msra.mxu0 0.0
        %802 = vmatprep.subr.mxu0 0.0
        %803 = vmatpush1.msra.mxu0 0.0
        %804 = vmatprep.subr.mxu0 0.0
        %805 = vmatpush1.msra.mxu0 0.0
        %806 = vmatprep.subr.mxu0 0.0
        %807 = vmatpush1.msra.mxu0 0.0
        %808 = vmatprep.subr.mxu0 0.0
        %809 = vmatpush1.msra.mxu0 0.0
        %810 = vmatprep.mubr.f32.mxu0 0.0
        %811 = vmatmul.mubr.f32.gmra.mrb[0].mxu0 %v744
        %v812 = vpop.f32.mrb[0].mxu0
        %v813 = vadd.f32 0.0, %v812
        %v814 = vpop.f32.mrb[0].mxu0
        %815 = vdwg.mxu0
        %v816 = vadd.f32 %v735, %v813
        %v817 = vrcp.pop %v739
        %v818 = vmul.f32 %v816, %v817
        %819 = vrot.lane.b32.xlu0 %v301, 104
        %v820 = vpop.permute.xlu0 %819
        %821 = vrot.lane.b32.xlu0 %v301, 72
        %v822 = vpop.permute.xlu0 %821
        %v823 = vsel %vm305, %v820, 0
        %v825 = vsel %vm305, %v822, 0
        %827 = vmatprep.subr.mxu0 0.0
        %828 = vmatpush1.xpose.msra.mxu0 %v825
        %829 = vmatprep.subr.mxu0 0.0
        %830 = vmatpush1.xpose.msra.mxu0 0.0
        %831 = vmatprep.subr.mxu0 0.0
        %832 = vmatpush1.xpose.msra.mxu0 0.0
        %833 = vmatprep.subr.mxu0 0.0
        %834 = vmatpush1.xpose.msra.mxu0 0.0
        %835 = vmatprep.subr.mxu0 0.0
        %836 = vmatpush1.xpose.msra.mxu0 0.0
        %837 = vmatprep.subr.mxu0 0.0
        %838 = vmatpush1.xpose.msra.mxu0 0.0
        %839 = vmatprep.subr.mxu0 0.0
        %840 = vmatpush1.xpose.msra.mxu0 0.0
        %841 = vmatprep.subr.mxu0 0.0
        %842 = vmatpush1.xpose.msra.mxu0 0.0
        %843 = vmatprep.subr.mxu0 0.0
        %844 = vmatpush1.xpose.msra.mxu0 0.0
        %845 = vmatprep.subr.mxu0 0.0
        %846 = vmatpush1.xpose.msra.mxu0 0.0
        %847 = vmatprep.subr.mxu0 0.0
        %848 = vmatpush1.xpose.msra.mxu0 0.0
        %849 = vmatprep.subr.mxu0 0.0
        %850 = vmatpush1.xpose.msra.mxu0 0.0
        %851 = vmatprep.subr.mxu0 0.0
        %852 = vmatpush1.xpose.msra.mxu0 0.0
        %853 = vmatprep.subr.mxu0 0.0
        %854 = vmatpush1.xpose.msra.mxu0 0.0
        %855 = vmatprep.subr.mxu0 0.0
        %856 = vmatpush1.xpose.msra.mxu0 0.0
        %857 = vmatprep.subr.mxu0 0.0
        %858 = vmatpush1.xpose.msra.mxu0 0.0
        %859 = vmatprep.subr.mxu0 0.0
        %860 = vmatpush1.xpose.msra.mxu0 0.0
        %861 = vmatprep.subr.mxu0 0.0
        %862 = vmatpush1.xpose.msra.mxu0 0.0
        %863 = vmatprep.subr.mxu0 0.0
        %864 = vmatpush1.xpose.msra.mxu0 0.0
        %865 = vmatprep.subr.mxu0 0.0
        %866 = vmatpush1.xpose.msra.mxu0 0.0
        %867 = vmatprep.subr.mxu0 0.0
        %868 = vmatpush1.xpose.msra.mxu0 0.0
        %869 = vmatprep.subr.mxu0 0.0
        %870 = vmatpush1.xpose.msra.mxu0 0.0
        %871 = vmatprep.subr.mxu0 0.0
        %872 = vmatpush1.xpose.msra.mxu0 0.0
        %873 = vmatprep.subr.mxu0 0.0
        %874 = vmatpush1.xpose.msra.mxu0 0.0
        %875 = vmatprep.subr.mxu0 0.0
        %876 = vmatpush1.xpose.msra.mxu0 0.0
        %877 = vmatprep.subr.mxu0 0.0
        %878 = vmatpush1.xpose.msra.mxu0 0.0
        %879 = vmatprep.subr.mxu0 0.0
        %880 = vmatpush1.xpose.msra.mxu0 0.0
        %881 = vmatprep.subr.mxu0 0.0
        %882 = vmatpush1.xpose.msra.mxu0 0.0
        %883 = vmatprep.subr.mxu0 0.0
        %884 = vmatpush1.xpose.msra.mxu0 0.0
        %885 = vmatprep.subr.mxu0 0.0
        %886 = vmatpush1.xpose.msra.mxu0 0.0
        %887 = vmatprep.subr.mxu0 0.0
        %888 = vmatpush1.xpose.msra.mxu0 0.0
        %889 = vmatprep.subr.mxu0 0.0
        %890 = vmatpush1.xpose.msra.mxu0 0.0
        %891 = vmatprep.mubr.f32.mxu0 0.0
        %892 = vmatmul.mubr.f32.gmra.mrb[0].mxu0 %v823
        %v893 = vpop.f32.mrb[0].mxu0
        %v894 = vadd.f32 0.0, %v893
        %v895 = vpop.f32.mrb[0].mxu0
        %896 = vdwg.mxu0
        %v897 = vsel %vm380, %v894, -inf
        %v898 = vsel %vm305, %v897, -inf
        %899 = vmax.xlane.f32.xlu0 %v898
        %v900 = vpop.xlane.xlu0 %899
        %v901 = vsub.f32 -inf, %v900
        %v902 = vmul.f32 %v901, 1.442695
        %v903 = vpow.pop %v902
        %v904 = vsub.f32 %v897, %v900
        %v905 = vmul.f32 %v904, 1.442695
        %v906 = vpow.pop %v905
        %v907 = vmul.f32 %v903, 0.0
        %v908 = vsel %vm305, %v906, 0.0
        %909 = vadd.xlane.f32.xlu0 %v908
        %v910 = vpop.xlane.xlu0 %909
        %v911 = vadd.f32 %v907, %v910
        %912 = vrot.lane.b32.xlu0 %v301, 40
        %v913 = vpop.permute.xlu0 %912
        %v916 = vsel %vm305, %v906, 0
        %918 = vmatprep.subr.mxu0 0.0
        %919 = vmatpush1.msra.mxu0 %v913
        %920 = vmatprep.subr.mxu0 0.0
        %921 = vmatpush1.msra.mxu0 0.0
        %922 = vmatprep.subr.mxu0 0.0
        %923 = vmatpush1.msra.mxu0 0.0
        %924 = vmatprep.subr.mxu0 0.0
        %925 = vmatpush1.msra.mxu0 0.0
        %926 = vmatprep.subr.mxu0 0.0
        %927 = vmatpush1.msra.mxu0 0.0
        %928 = vmatprep.subr.mxu0 0.0
        %929 = vmatpush1.msra.mxu0 0.0
        %930 = vmatprep.subr.mxu0 0.0
        %931 = vmatpush1.msra.mxu0 0.0
        %932 = vmatprep.subr.mxu0 0.0
        %933 = vmatpush1.msra.mxu0 0.0
        %934 = vmatprep.subr.mxu0 0.0
        %935 = vmatpush1.msra.mxu0 0.0
        %936 = vmatprep.subr.mxu0 0.0
        %937 = vmatpush1.msra.mxu0 0.0
        %938 = vmatprep.subr.mxu0 0.0
        %939 = vmatpush1.msra.mxu0 0.0
        %940 = vmatprep.subr.mxu0 0.0
        %941 = vmatpush1.msra.mxu0 0.0
        %942 = vmatprep.subr.mxu0 0.0
        %943 = vmatpush1.msra.mxu0 0.0
        %944 = vmatprep.subr.mxu0 0.0
        %945 = vmatpush1.msra.mxu0 0.0
        %946 = vmatprep.subr.mxu0 0.0
        %947 = vmatpush1.msra.mxu0 0.0
        %948 = vmatprep.subr.mxu0 0.0
        %949 = vmatpush1.msra.mxu0 0.0
        %950 = vmatprep.subr.mxu0 0.0
        %951 = vmatpush1.msra.mxu0 0.0
        %952 = vmatprep.subr.mxu0 0.0
        %953 = vmatpush1.msra.mxu0 0.0
        %954 = vmatprep.subr.mxu0 0.0
        %955 = vmatpush1.msra.mxu0 0.0
        %956 = vmatprep.subr.mxu0 0.0
        %957 = vmatpush1.msra.mxu0 0.0
        %958 = vmatprep.subr.mxu0 0.0
        %959 = vmatpush1.msra.mxu0 0.0
        %960 = vmatprep.subr.mxu0 0.0
        %961 = vmatpush1.msra.mxu0 0.0
        %962 = vmatprep.subr.mxu0 0.0
        %963 = vmatpush1.msra.mxu0 0.0
        %964 = vmatprep.subr.mxu0 0.0
        %965 = vmatpush1.msra.mxu0 0.0
        %966 = vmatprep.subr.mxu0 0.0
        %967 = vmatpush1.msra.mxu0 0.0
        %968 = vmatprep.subr.mxu0 0.0
        %969 = vmatpush1.msra.mxu0 0.0
        %970 = vmatprep.subr.mxu0 0.0
        %971 = vmatpush1.msra.mxu0 0.0
        %972 = vmatprep.subr.mxu0 0.0
        %973 = vmatpush1.msra.mxu0 0.0
        %974 = vmatprep.subr.mxu0 0.0
        %975 = vmatpush1.msra.mxu0 0.0
        %976 = vmatprep.subr.mxu0 0.0
        %977 = vmatpush1.msra.mxu0 0.0
        %978 = vmatprep.subr.mxu0 0.0
        %979 = vmatpush1.msra.mxu0 0.0
        %980 = vmatprep.subr.mxu0 0.0
        %981 = vmatpush1.msra.mxu0 0.0
        %982 = vmatprep.mubr.f32.mxu0 0.0
        %983 = vmatmul.mubr.f32.gmra.mrb[0].mxu0 %v916
        %v984 = vpop.f32.mrb[0].mxu0
        %v985 = vadd.f32 0.0, %v984
        %v986 = vpop.f32.mrb[0].mxu0
        %987 = vdwg.mxu0
        %v988 = vadd.f32 %v907, %v985
        %v989 = vrcp.pop %v911
        %v990 = vmul.f32 %v988, %v989
        %992 = vrot.lane.b32.xlu0 %v646, 8
        %v993 = vpop.permute.xlu0 %992
        %996 = vrot.lane.b32.xlu0 %v818, 16
        %v997 = vpop.permute.xlu0 %996
        %1000 = vrot.lane.b32.xlu0 %v990, 24
        %v1001 = vpop.permute.xlu0 %1000
        %v1003 = vsel %vm305, %v474, %v993
        %vm1004 = vcmask 130048
        %v1005 = vsel %vm1004, %v1003, %v997
        %vm1006 = vcmask 195584
        %v1007 = vsel %vm1006, %v1005, %v1001
        %1008 = vst.msk [vmem:[#allocation3] sm:$0xff] %vm220, %v1007
        %v1009 = vld [vmem:[#allocation3] sm:$0xff]
        %v1010 = vld [vmem:[#allocation9] sm:$0xff]
        %v1011 = vld [vmem:[#allocation9 + $0x8] sm:$0xff]
        %v1012 = vld [vmem:[#allocation9 + $0x10] sm:$0xff]
        %v1013 = vld [vmem:[#allocation9 + $0x18] sm:$0xff]
        %v1015 = vsel %vm220, %v1009, 0
        %1017 = vmatprep.subr.mxu0 0.0
        %1018 = vmatpush1.msra.mxu0 %v1010
        %1019 = vmatprep.subr.mxu0 0.0
        %1020 = vmatpush1.msra.mxu0 %v1011
        %1021 = vmatprep.subr.mxu0 0.0
        %1022 = vmatpush1.msra.mxu0 %v1012
        %1023 = vmatprep.subr.mxu0 0.0
        %1024 = vmatpush1.msra.mxu0 %v1013
        %1025 = vmatprep.subr.mxu0 0.0
        %1026 = vmatpush1.msra.mxu0 0.0
        %1027 = vmatprep.subr.mxu0 0.0
        %1028 = vmatpush1.msra.mxu0 0.0
        %1029 = vmatprep.subr.mxu0 0.0
        %1030 = vmatpush1.msra.mxu0 0.0
        %1031 = vmatprep.subr.mxu0 0.0
        %1032 = vmatpush1.msra.mxu0 0.0
        %1033 = vmatprep.subr.mxu0 0.0
        %1034 = vmatpush1.msra.mxu0 0.0
        %1035 = vmatprep.subr.mxu0 0.0
        %1036 = vmatpush1.msra.mxu0 0.0
        %1037 = vmatprep.subr.mxu0 0.0
        %1038 = vmatpush1.msra.mxu0 0.0
        %1039 = vmatprep.subr.mxu0 0.0
        %1040 = vmatpush1.msra.mxu0 0.0
        %1041 = vmatprep.subr.mxu0 0.0
        %1042 = vmatpush1.msra.mxu0 0.0
        %1043 = vmatprep.subr.mxu0 0.0
        %1044 = vmatpush1.msra.mxu0 0.0
        %1045 = vmatprep.subr.mxu0 0.0
        %1046 = vmatpush1.msra.mxu0 0.0
        %1047 = vmatprep.subr.mxu0 0.0
        %1048 = vmatpush1.msra.mxu0 0.0
        %1049 = vmatprep.subr.mxu0 0.0
        %1050 = vmatpush1.msra.mxu0 0.0
        %1051 = vmatprep.subr.mxu0 0.0
        %1052 = vmatpush1.msra.mxu0 0.0
        %1053 = vmatprep.subr.mxu0 0.0
        %1054 = vmatpush1.msra.mxu0 0.0
        %1055 = vmatprep.subr.mxu0 0.0
        %1056 = vmatpush1.msra.mxu0 0.0
        %1057 = vmatprep.subr.mxu0 0.0
        %1058 = vmatpush1.msra.mxu0 0.0
        %1059 = vmatprep.subr.mxu0 0.0
        %1060 = vmatpush1.msra.mxu0 0.0
        %1061 = vmatprep.subr.mxu0 0.0
        %1062 = vmatpush1.msra.mxu0 0.0
        %1063 = vmatprep.subr.mxu0 0.0
        %1064 = vmatpush1.msra.mxu0 0.0
        %1065 = vmatprep.subr.mxu0 0.0
        %1066 = vmatpush1.msra.mxu0 0.0
        %1067 = vmatprep.subr.mxu0 0.0
        %1068 = vmatpush1.msra.mxu0 0.0
        %1069 = vmatprep.subr.mxu0 0.0
        %1070 = vmatpush1.msra.mxu0 0.0
        %1071 = vmatprep.subr.mxu0 0.0
        %1072 = vmatpush1.msra.mxu0 0.0
        %1073 = vmatprep.subr.mxu0 0.0
        %1074 = vmatpush1.msra.mxu0 0.0
        %1075 = vmatprep.subr.mxu0 0.0
        %1076 = vmatpush1.msra.mxu0 0.0
        %1077 = vmatprep.subr.mxu0 0.0
        %1078 = vmatpush1.msra.mxu0 0.0
        %1079 = vmatprep.subr.mxu0 0.0
        %1080 = vmatpush1.msra.mxu0 0.0
        %1081 = vmatprep.mubr.f32.mxu0 0.0
        %1082 = vmatmul.mubr.f32.gmra.mrb[0].mxu0 %v1015
        %v1083 = vpop.f32.mrb[0].mxu0
        %v1084 = vadd.f32 0.0, %v1083
        %v1085 = vpop.f32.mrb[0].mxu0
        %1086 = vdwg.mxu0
        %1087 = vst.msk [vmem:[%s214] sm:$0xff] %vm220, %v1084
        %s1088 = sand.u32 %s97, 1
        %s1089 = scalar_lea.sflag [#allocation6], %s1088
        %s1090 = sand.u32 %s97, 1
        %s1091 = smul.addr %s1090, 8
        %s1092 = scalar_lea.vmem [#allocation10], %s1091
        // Predicated region
        $region45: #{tpu_custom_call.1} parent=31 // pred_check
          %p1093 = pneg %p107
        $region46: #{tpu_custom_call.1} parent=31 // pred_check_branch
          %1095 = sbr.rel (%p1093) target = $region48
        $region47: #{tpu_custom_call.1} parent=31 // pred_region
          %s1097 = ssub.s32 128, 128
          %1098 = vsyncadd %s1089, %s1097
          %s1099 = smul.addr %s21, 128
          %s1100 = scalar_lea.hbm %s3, %s1099
          %s1102 = sshll.u32 %s1092, 4
          %s1103 = int_to_ptr.vmem [resolvable:$true] %s1102
          %1105 = dma.vmem_to_hbm [thread:$0]  %s1103, 128, %s1100, %s1089
        $region48: #{tpu_custom_call.1} parent=31 // pred_fallthru
          _
      $region32: #{tpu_custom_call.1} parent=5 // pred_fallthru
        _
      %p1106 = scmp.le.s32.totalorder 2, %s16
      // Predicated region
      $region49: #{tpu_custom_call.1} parent=5 // pred_check
        %p1107 = pneg %p1106
      $region50: #{tpu_custom_call.1} parent=5 // pred_check_branch
        %1109 = sbr.rel (%p1107) target = $region52
      $region51: #{tpu_custom_call.1} parent=5 // pred_region
        %s1110 = ssub.s32 %s16, 2
        // Predicated region
        $region53: #{tpu_custom_call.1} parent=51 // pred_check
          %p1111 = pneg %p113
        $region54: #{tpu_custom_call.1} parent=51 // pred_check_branch
          %1113 = sbr.rel (%p1111) target = $region56
        $region55: #{tpu_custom_call.1} parent=51 // pred_region
          %s1114 = sand.u32 %s98, 1
          %s1115 = scalar_lea.sflag [#allocation6], %s1114
          %s1116 = sand.u32 %s98, 1
          %s1117 = smul.addr %s1116, 8
          %s1118 = scalar_lea.vmem [#allocation10], %s1117
          %1119 = dma.done %s1115, 128
        $region56: #{tpu_custom_call.1} parent=51 // pred_fallthru
          _
      $region52: #{tpu_custom_call.1} parent=5 // pred_fallthru
        _
    $region6: #{tpu_custom_call.1} parent=1 // loop_footer
      %s20 = sadd.s32 1, %s16
    $region7: #{tpu_custom_call.1} parent=1 // loop_footer_branch
      %15 = sbr.rel target = $region3
    $region8: #{tpu_custom_call.1} parent=1 // loop_exit
      _
    %1120 = vsyncpa [#allocation5], 1
    %s1121 = scalar_lea.sflag [#allocation5], 1
    %1122 = vsyncpa %s1121, 1
    %1123 = vsyncpa [#allocation8], 1
    %1124 = vsyncpa [#allocation6], 1
    %s1125 = scalar_lea.sflag [#allocation6], 1
    %1126 = vsyncpa %s1125, 1

</llo_original>
